<compile_context>
chip_gen: v6e
topology: v6e:2x2x1
jax: 0.10.0
libtpu: 0.0.40
codegen_flags: <defaults>
</compile_context>

<pallas_src>
import numpy as np
import jax
import jax.numpy as jnp
from jax.experimental import pallas as pl
from jax.experimental.pallas import tpu as pltpu


def gcn_kernel(graph_ref, gadj_ref, cgadj_ref, gT_ref, cgT_ref,
               ei_ref, cei_ref, w_edge_ref, b_edge_ref, w_emb_ref,
               alpha_ref, o_ref):
    # graph_ref : (1, H, N, C)
    # gadj_ref  : (1, H, N, N)   per-head adjacency (g path)
    # cgadj_ref : (1, H, N, N)   per-head adjacency (C path)
    # gT_ref    : (1, N, N)      G transposed   (gT[m, n] = G[n, m])
    # cgT_ref   : (1, N, N)      C_G transposed
    # ei_ref    : (1, H*N, E)    edge_inital, heads folded into rows
    # cei_ref   : (1, H*N, E)    C_edge_inital
    # w_edge_ref: (2E, 2C)       block-diag [We^T, 0; 0, CWe^T]
    # b_edge_ref: (1, 2C)        [be | cbe]
    # w_emb_ref : (2C, E)        [Wg^T ; CWg^T]
    # alpha_ref : (1, 1) in SMEM (shared PReLU slope)
    # o_ref     : (1, H*N, E)
    _, H, N, C = graph_ref.shape
    E = o_ref.shape[2]
    f32 = jnp.float32

    # Normalized transposed graph adjacencies: Gn[m, n] = G[n, m] / sum_k G[k, m]
    gT = gT_ref[0]                                         # (N, N)
    cgT = cgT_ref[0]
    Gn = gT / jnp.sum(gT, axis=1, keepdims=True)           # (N, N)
    CGn = cgT / jnp.sum(cgT, axis=1, keepdims=True)

    # Fused edge-value Linear for both paths: one K=2E matmul over all heads.
    x_cat = jnp.concatenate([ei_ref[0], cei_ref[0]], axis=1)        # (H*N, 2E)
    edge_cat = jnp.dot(x_cat, w_edge_ref[...],
                       preferred_element_type=f32) + b_edge_ref[...]  # (H*N, 2C)

    # Per-head graph aggregation + per-head adjacency matmuls (H is tiny, unrolled).
    rows = []
    for h in range(H):
        e_h = edge_cat[h * N:(h + 1) * N, 0:C]             # (N, C)   g-path edge
        ce_h = edge_cat[h * N:(h + 1) * N, C:2 * C]        # (N, C)   C-path edge
        g_h = graph_ref[0, h]                              # (N, C)

        val_h = g_h + jnp.dot(Gn, e_h, preferred_element_type=f32)
        cval_h = g_h + jnp.dot(CGn, ce_h, preferred_element_type=f32)

        tmp_h = jnp.dot(gadj_ref[0, h], val_h, preferred_element_type=f32)
        ctmp_h = jnp.dot(cgadj_ref[0, h], cval_h, preferred_element_type=f32)
        rows.append(jnp.concatenate([tmp_h, ctmp_h], axis=1))       # (N, 2C)
    tmp_cat = jnp.concatenate(rows, axis=0)                         # (H*N, 2C)

    # Fused embedding Linear of both paths (g_feat + Cg_feat in one K=2C matmul).
    feat = jnp.dot(tmp_cat, w_emb_ref[...], preferred_element_type=f32)  # (H*N, E)

    # PReLU with single shared slope (scalar from SMEM).
    alpha = alpha_ref[0, 0]
    out = jnp.where(feat >= 0, feat, alpha * feat)
    # TODO(synk): dropout is p=0 in this module config (no-op); for p>0 add a
    # pltpu.prng_seed + stateful_bernoulli mask here.
    o_ref[0] = out.astype(o_ref.dtype)


def graph_convolution(graph, g_adj, cg_adj, G, C_G, edge_init, c_edge_init,
                      We, be, CWe, cbe, Wg, CWg, alpha):
    B, H, N, C = graph.shape
    E = We.shape[1]                      # edge_value weight: (C, E) (PyTorch (out,in))
    dt = graph.dtype

    # ---- host-side weight fusion (done once, outside the kernel) ----
    W_edge = jnp.zeros((2 * E, 2 * C), dt)
    W_edge = W_edge.at[:E, :C].set(We.T).at[E:, C:].set(CWe.T)       # block-diag
    b_edge = jnp.concatenate([be, cbe]).reshape(1, 2 * C).astype(dt)
    W_emb = jnp.concatenate([Wg.T, CWg.T], axis=0).astype(dt)        # (2C, E)

    # ---- layout plumbing (pure reshape/transpose, no compute) ----
    GT = jnp.swapaxes(G, -1, -2)
    CGT = jnp.swapaxes(C_G, -1, -2)
    ei_f = edge_init.reshape(B, H * N, E)
    cei_f = c_edge_init.reshape(B, H * N, E)
    alpha2 = jnp.asarray(alpha, jnp.float32).reshape(1, 1)

    out = pl.pallas_call(
        gcn_kernel,
        out_shape=jax.ShapeDtypeStruct((B, H * N, E), dt),
        grid_spec=pltpu.PrefetchScalarGridSpec(
            num_scalar_prefetch=0,
            grid=(B,),
            in_specs=[
                pl.BlockSpec((1, H, N, C), lambda b: (b, 0, 0, 0)),   # graph
                pl.BlockSpec((1, H, N, N), lambda b: (b, 0, 0, 0)),   # g_adjacency
                pl.BlockSpec((1, H, N, N), lambda b: (b, 0, 0, 0)),   # Cg_adjacency
                pl.BlockSpec((1, N, N), lambda b: (b, 0, 0)),         # G^T
                pl.BlockSpec((1, N, N), lambda b: (b, 0, 0)),         # C_G^T
                pl.BlockSpec((1, H * N, E), lambda b: (b, 0, 0)),     # edge_inital
                pl.BlockSpec((1, H * N, E), lambda b: (b, 0, 0)),     # C_edge_inital
                pl.BlockSpec((2 * E, 2 * C), lambda b: (0, 0)),       # fused edge W
                pl.BlockSpec((1, 2 * C), lambda b: (0, 0)),           # fused edge bias
                pl.BlockSpec((2 * C, E), lambda b: (0, 0)),           # fused embed W
                pl.BlockSpec(memory_space=pltpu.MemorySpace.SMEM),    # PReLU alpha
            ],
            out_specs=pl.BlockSpec((1, H * N, E), lambda b: (b, 0, 0)),
        ),
        compiler_params=pltpu.CompilerParams(
            dimension_semantics=("parallel",)),
    )(graph, g_adj, cg_adj, GT, CGT, ei_f, cei_f, W_edge, b_edge, W_emb, alpha2)

    return out.reshape(B, H, N, E)


def reference_forward(graph, g_adj, cg_adj, G, C_G, ei, cei,
                      We, be, CWe, cbe, Wg, CWg, alpha):
    # Pure-JAX mirror of the PyTorch forward.
    div = jnp.sum(G, axis=1)[:, None, :, None]
    edge = jnp.einsum('bhne,ce->bhnc', ei, We) + be
    value = graph + jnp.einsum('bmn,bhnc->bhmc', jnp.swapaxes(G, -1, -2), edge) / div
    gfeat = jnp.einsum('bhmn,bhnc->bhmc', g_adj, value)
    gfeat = jnp.einsum('bhnc,ec->bhne', gfeat, Wg)

    cdiv = jnp.sum(C_G, axis=1)[:, None, :, None]
    cedge = jnp.einsum('bhne,ce->bhnc', cei, CWe) + cbe
    cvalue = graph + jnp.einsum('bmn,bhnc->bhmc', jnp.swapaxes(C_G, -1, -2), cedge) / cdiv
    cgfeat = jnp.einsum('bhmn,bhnc->bhmc', cg_adj, cvalue)
    cgfeat = jnp.einsum('bhnc,ec->bhne', cgfeat, CWg)

    y = gfeat + cgfeat
    return jnp.where(y >= 0, y, alpha * y)      # PReLU; dropout p=0 is a no-op


if __name__ == "__main__":
    # Small shapes consistent with the module defaults:
    # in_dims=2, embedding_dims=16, batch=2, heads=4, nodes=8
    B, H, N = 2, 4, 8
    IN_DIMS, EMB = 2, 16

    key = jax.random.PRNGKey(0)
    ks = jax.random.split(key, 13)

    graph = jax.random.normal(ks[0], (B, H, N, IN_DIMS), jnp.float32)
    g_adj = jax.random.uniform(ks[1], (B, H, N, N), jnp.float32, 0.0, 1.0)
    cg_adj = jax.random.uniform(ks[2], (B, H, N, N), jnp.float32, 0.0, 1.0)
    G = jax.random.uniform(ks[3], (B, N, N), jnp.float32, 0.5, 1.5)     # positive -> safe colsum
    C_G = jax.random.uniform(ks[4], (B, N, N), jnp.float32, 0.5, 1.5)
    ei = jax.random.normal(ks[5], (B, H, N, EMB), jnp.float32)
    cei = jax.random.normal(ks[6], (B, H, N, EMB), jnp.float32)

    # module parameters (PyTorch Linear layout: weight = (out, in))
    We = 0.3 * jax.random.normal(ks[7], (IN_DIMS, EMB), jnp.float32)    # edge_value
    be = 0.1 * jax.random.normal(ks[8], (IN_DIMS,), jnp.float32)
    CWe = 0.3 * jax.random.normal(ks[9], (IN_DIMS, EMB), jnp.float32)   # C_edge_value
    cbe = 0.1 * jax.random.normal(ks[10], (IN_DIMS,), jnp.float32)
    Wg = 0.3 * jax.random.normal(ks[11], (EMB, IN_DIMS), jnp.float32)   # g_embedding (no bias)
    CWg = 0.3 * jax.random.normal(ks[12], (EMB, IN_DIMS), jnp.float32)  # Cg_embedding (no bias)
    alpha = jnp.float32(0.25)                                           # PReLU default slope

    out = graph_convolution(graph, g_adj, cg_adj, G, C_G, ei, cei,
                            We, be, CWe, cbe, Wg, CWg, alpha)
    out = jax.block_until_ready(out)

    ref = reference_forward(graph, g_adj, cg_adj, G, C_G, ei, cei,
                            We, be, CWe, cbe, Wg, CWg, alpha)
    np.testing.assert_allclose(np.asarray(out), np.asarray(ref),
                               rtol=1e-3, atol=1e-3)

    print("KERNEL_OK")
</pallas_src>

<mosaic_0001>
module attributes {stable_mosaic.version = 11 : i64} {
  func.func @gcn_kernel(%arg0: i32, %arg1: memref<1x4x8x2xf32, #tpu.memory_space<vmem>>, %arg2: memref<1x4x8x8xf32, #tpu.memory_space<vmem>>, %arg3: memref<1x4x8x8xf32, #tpu.memory_space<vmem>>, %arg4: memref<1x8x8xf32, #tpu.memory_space<vmem>>, %arg5: memref<1x8x8xf32, #tpu.memory_space<vmem>>, %arg6: memref<1x32x16xf32, #tpu.memory_space<vmem>>, %arg7: memref<1x32x16xf32, #tpu.memory_space<vmem>>, %arg8: memref<32x4xf32, #tpu.memory_space<vmem>>, %arg9: memref<1x4xf32, #tpu.memory_space<vmem>>, %arg10: memref<4x16xf32, #tpu.memory_space<vmem>>, %arg11: memref<1x1xf32, #tpu.memory_space<smem>>, %arg12: memref<1x32x16xf32, #tpu.memory_space<vmem>>) attributes {dimension_semantics = [#tpu.dimension_semantics<parallel>], iteration_bounds = array<i64: 2>, scalar_prefetch = 0 : i64, scratch_operands = 0 : i64, tpu.core_type = #tpu.core_type<tc>, window_params = [{transform_indices = @transform_0, window_bounds = array<i64: 1, 4, 8, 2>}, {transform_indices = @transform_1, window_bounds = array<i64: 1, 4, 8, 8>}, {transform_indices = @transform_2, window_bounds = array<i64: 1, 4, 8, 8>}, {transform_indices = @transform_3, window_bounds = array<i64: 1, 8, 8>}, {transform_indices = @transform_4, window_bounds = array<i64: 1, 8, 8>}, {transform_indices = @transform_5, window_bounds = array<i64: 1, 32, 16>}, {transform_indices = @transform_6, window_bounds = array<i64: 1, 32, 16>}, {pipeline_mode = #tpu.pipeline_mode<synchronous>, transform_indices = @transform_7, window_bounds = array<i64: 32, 4>}, {pipeline_mode = #tpu.pipeline_mode<synchronous>, transform_indices = @transform_8, window_bounds = array<i64: 1, 4>}, {pipeline_mode = #tpu.pipeline_mode<synchronous>, transform_indices = @transform_9, window_bounds = array<i64: 4, 16>}, {transform_indices = @transform_10, window_bounds = array<i64: 1, 1>}, {transform_indices = @transform_11, window_bounds = array<i64: 1, 32, 16>}]} {
    %c0 = arith.constant 0 : index
    %c0_0 = arith.constant 0 : index
    %c0_1 = arith.constant 0 : index
    %0 = vector.load %arg4[%c0, %c0_0, %c0_1] : memref<1x8x8xf32, #tpu.memory_space<vmem>>, vector<1x8x8xf32>
    %1 = vector.shape_cast %0 : vector<1x8x8xf32> to vector<8x8xf32>
    %c0_2 = arith.constant 0 : index
    %c0_3 = arith.constant 0 : index
    %c0_4 = arith.constant 0 : index
    %2 = vector.load %arg5[%c0_2, %c0_3, %c0_4] : memref<1x8x8xf32, #tpu.memory_space<vmem>>, vector<1x8x8xf32>
    %3 = vector.shape_cast %2 : vector<1x8x8xf32> to vector<8x8xf32>
    %cst = arith.constant dense<0.000000e+00> : vector<8xf32>
    %4 = vector.multi_reduction <add>, %1, %cst [1] : vector<8x8xf32> to vector<8xf32>
    %5 = vector.shape_cast %4 : vector<8xf32> to vector<8x1xf32>
    %6 = vector.broadcast %5 : vector<8x1xf32> to vector<8x8xf32>
    %7 = arith.divf %1, %6 : vector<8x8xf32>
    %cst_5 = arith.constant dense<0.000000e+00> : vector<8xf32>
    %8 = vector.multi_reduction <add>, %3, %cst_5 [1] : vector<8x8xf32> to vector<8xf32>
    %9 = vector.shape_cast %8 : vector<8xf32> to vector<8x1xf32>
    %10 = vector.broadcast %9 : vector<8x1xf32> to vector<8x8xf32>
    %11 = arith.divf %3, %10 : vector<8x8xf32>
    %c0_6 = arith.constant 0 : index
    %c0_7 = arith.constant 0 : index
    %c0_8 = arith.constant 0 : index
    %12 = vector.load %arg6[%c0_6, %c0_7, %c0_8] : memref<1x32x16xf32, #tpu.memory_space<vmem>>, vector<1x32x16xf32>
    %13 = vector.shape_cast %12 : vector<1x32x16xf32> to vector<32x16xf32>
    %c0_9 = arith.constant 0 : index
    %c0_10 = arith.constant 0 : index
    %c0_11 = arith.constant 0 : index
    %14 = vector.load %arg7[%c0_9, %c0_10, %c0_11] : memref<1x32x16xf32, #tpu.memory_space<vmem>>, vector<1x32x16xf32>
    %15 = vector.shape_cast %14 : vector<1x32x16xf32> to vector<32x16xf32>
    %16 = tpu.concatenate %13, %15 in 1 : vector<32x16xf32>, vector<32x16xf32> -> vector<32x32xf32>
    %c0_12 = arith.constant 0 : index
    %c0_13 = arith.constant 0 : index
    %17 = vector.load %arg8[%c0_12, %c0_13] : memref<32x4xf32, #tpu.memory_space<vmem>>, vector<32x4xf32>
    %cst_14 = arith.constant dense<0.000000e+00> : vector<32x4xf32>
    %18 = tpu.matmul %16, %17, %cst_14 {dimension_numbers = #tpu.dot_dimension_numbers<[1], [0], [0], [1], [0, 0, 1, 1], [], []>} : vector<32x32xf32>, vector<32x4xf32>, vector<32x4xf32> -> vector<32x4xf32>
    %c0_15 = arith.constant 0 : index
    %c0_16 = arith.constant 0 : index
    %19 = vector.load %arg9[%c0_15, %c0_16] : memref<1x4xf32, #tpu.memory_space<vmem>>, vector<1x4xf32>
    %20 = vector.broadcast %19 : vector<1x4xf32> to vector<32x4xf32>
    %21 = arith.addf %18, %20 : vector<32x4xf32>
    %22 = vector.extract_strided_slice %21 {offsets = [0, 0], sizes = [8, 2], strides = [1, 1]} : vector<32x4xf32> to vector<8x2xf32>
    %23 = vector.extract_strided_slice %21 {offsets = [0, 2], sizes = [8, 2], strides = [1, 1]} : vector<32x4xf32> to vector<8x2xf32>
    %c0_17 = arith.constant 0 : index
    %c0_18 = arith.constant 0 : index
    %c0_19 = arith.constant 0 : index
    %c0_20 = arith.constant 0 : index
    %24 = vector.load %arg1[%c0_17, %c0_18, %c0_19, %c0_20] : memref<1x4x8x2xf32, #tpu.memory_space<vmem>>, vector<1x1x8x2xf32>
    %25 = vector.shape_cast %24 : vector<1x1x8x2xf32> to vector<8x2xf32>
    %cst_21 = arith.constant dense<0.000000e+00> : vector<8x2xf32>
    %26 = tpu.matmul %7, %22, %cst_21 {dimension_numbers = #tpu.dot_dimension_numbers<[1], [0], [0], [1], [0, 0, 1, 1], [], []>} : vector<8x8xf32>, vector<8x2xf32>, vector<8x2xf32> -> vector<8x2xf32>
    %27 = arith.addf %25, %26 : vector<8x2xf32>
    %cst_22 = arith.constant dense<0.000000e+00> : vector<8x2xf32>
    %28 = tpu.matmul %11, %23, %cst_22 {dimension_numbers = #tpu.dot_dimension_numbers<[1], [0], [0], [1], [0, 0, 1, 1], [], []>} : vector<8x8xf32>, vector<8x2xf32>, vector<8x2xf32> -> vector<8x2xf32>
    %29 = arith.addf %25, %28 : vector<8x2xf32>
    %c0_23 = arith.constant 0 : index
    %c0_24 = arith.constant 0 : index
    %c0_25 = arith.constant 0 : index
    %c0_26 = arith.constant 0 : index
    %30 = vector.load %arg2[%c0_23, %c0_24, %c0_25, %c0_26] : memref<1x4x8x8xf32, #tpu.memory_space<vmem>>, vector<1x1x8x8xf32>
    %31 = vector.shape_cast %30 : vector<1x1x8x8xf32> to vector<8x8xf32>
    %cst_27 = arith.constant dense<0.000000e+00> : vector<8x2xf32>
    %32 = tpu.matmul %31, %27, %cst_27 {dimension_numbers = #tpu.dot_dimension_numbers<[1], [0], [0], [1], [0, 0, 1, 1], [], []>} : vector<8x8xf32>, vector<8x2xf32>, vector<8x2xf32> -> vector<8x2xf32>
    %c0_28 = arith.constant 0 : index
    %c0_29 = arith.constant 0 : index
    %c0_30 = arith.constant 0 : index
    %c0_31 = arith.constant 0 : index
    %33 = vector.load %arg3[%c0_28, %c0_29, %c0_30, %c0_31] : memref<1x4x8x8xf32, #tpu.memory_space<vmem>>, vector<1x1x8x8xf32>
    %34 = vector.shape_cast %33 : vector<1x1x8x8xf32> to vector<8x8xf32>
    %cst_32 = arith.constant dense<0.000000e+00> : vector<8x2xf32>
    %35 = tpu.matmul %34, %29, %cst_32 {dimension_numbers = #tpu.dot_dimension_numbers<[1], [0], [0], [1], [0, 0, 1, 1], [], []>} : vector<8x8xf32>, vector<8x2xf32>, vector<8x2xf32> -> vector<8x2xf32>
    %36 = tpu.concatenate %32, %35 in 1 : vector<8x2xf32>, vector<8x2xf32> -> vector<8x4xf32>
    %37 = vector.extract_strided_slice %21 {offsets = [8, 0], sizes = [8, 2], strides = [1, 1]} : vector<32x4xf32> to vector<8x2xf32>
    %38 = vector.extract_strided_slice %21 {offsets = [8, 2], sizes = [8, 2], strides = [1, 1]} : vector<32x4xf32> to vector<8x2xf32>
    %c0_33 = arith.constant 0 : index
    %c1 = arith.constant 1 : index
    %c0_34 = arith.constant 0 : index
    %c0_35 = arith.constant 0 : index
    %39 = vector.load %arg1[%c0_33, %c1, %c0_34, %c0_35] : memref<1x4x8x2xf32, #tpu.memory_space<vmem>>, vector<1x1x8x2xf32>
    %40 = vector.shape_cast %39 : vector<1x1x8x2xf32> to vector<8x2xf32>
    %cst_36 = arith.constant dense<0.000000e+00> : vector<8x2xf32>
    %41 = tpu.matmul %7, %37, %cst_36 {dimension_numbers = #tpu.dot_dimension_numbers<[1], [0], [0], [1], [0, 0, 1, 1], [], []>} : vector<8x8xf32>, vector<8x2xf32>, vector<8x2xf32> -> vector<8x2xf32>
    %42 = arith.addf %40, %41 : vector<8x2xf32>
    %cst_37 = arith.constant dense<0.000000e+00> : vector<8x2xf32>
    %43 = tpu.matmul %11, %38, %cst_37 {dimension_numbers = #tpu.dot_dimension_numbers<[1], [0], [0], [1], [0, 0, 1, 1], [], []>} : vector<8x8xf32>, vector<8x2xf32>, vector<8x2xf32> -> vector<8x2xf32>
    %44 = arith.addf %40, %43 : vector<8x2xf32>
    %c0_38 = arith.constant 0 : index
    %c1_39 = arith.constant 1 : index
    %c0_40 = arith.constant 0 : index
    %c0_41 = arith.constant 0 : index
    %45 = vector.load %arg2[%c0_38, %c1_39, %c0_40, %c0_41] : memref<1x4x8x8xf32, #tpu.memory_space<vmem>>, vector<1x1x8x8xf32>
    %46 = vector.shape_cast %45 : vector<1x1x8x8xf32> to vector<8x8xf32>
    %cst_42 = arith.constant dense<0.000000e+00> : vector<8x2xf32>
    %47 = tpu.matmul %46, %42, %cst_42 {dimension_numbers = #tpu.dot_dimension_numbers<[1], [0], [0], [1], [0, 0, 1, 1], [], []>} : vector<8x8xf32>, vector<8x2xf32>, vector<8x2xf32> -> vector<8x2xf32>
    %c0_43 = arith.constant 0 : index
    %c1_44 = arith.constant 1 : index
    %c0_45 = arith.constant 0 : index
    %c0_46 = arith.constant 0 : index
    %48 = vector.load %arg3[%c0_43, %c1_44, %c0_45, %c0_46] : memref<1x4x8x8xf32, #tpu.memory_space<vmem>>, vector<1x1x8x8xf32>
    %49 = vector.shape_cast %48 : vector<1x1x8x8xf32> to vector<8x8xf32>
    %cst_47 = arith.constant dense<0.000000e+00> : vector<8x2xf32>
    %50 = tpu.matmul %49, %44, %cst_47 {dimension_numbers = #tpu.dot_dimension_numbers<[1], [0], [0], [1], [0, 0, 1, 1], [], []>} : vector<8x8xf32>, vector<8x2xf32>, vector<8x2xf32> -> vector<8x2xf32>
    %51 = tpu.concatenate %47, %50 in 1 : vector<8x2xf32>, vector<8x2xf32> -> vector<8x4xf32>
    %52 = vector.extract_strided_slice %21 {offsets = [16, 0], sizes = [8, 2], strides = [1, 1]} : vector<32x4xf32> to vector<8x2xf32>
    %53 = vector.extract_strided_slice %21 {offsets = [16, 2], sizes = [8, 2], strides = [1, 1]} : vector<32x4xf32> to vector<8x2xf32>
    %c0_48 = arith.constant 0 : index
    %c2 = arith.constant 2 : index
    %c0_49 = arith.constant 0 : index
    %c0_50 = arith.constant 0 : index
    %54 = vector.load %arg1[%c0_48, %c2, %c0_49, %c0_50] : memref<1x4x8x2xf32, #tpu.memory_space<vmem>>, vector<1x1x8x2xf32>
    %55 = vector.shape_cast %54 : vector<1x1x8x2xf32> to vector<8x2xf32>
    %cst_51 = arith.constant dense<0.000000e+00> : vector<8x2xf32>
    %56 = tpu.matmul %7, %52, %cst_51 {dimension_numbers = #tpu.dot_dimension_numbers<[1], [0], [0], [1], [0, 0, 1, 1], [], []>} : vector<8x8xf32>, vector<8x2xf32>, vector<8x2xf32> -> vector<8x2xf32>
    %57 = arith.addf %55, %56 : vector<8x2xf32>
    %cst_52 = arith.constant dense<0.000000e+00> : vector<8x2xf32>
    %58 = tpu.matmul %11, %53, %cst_52 {dimension_numbers = #tpu.dot_dimension_numbers<[1], [0], [0], [1], [0, 0, 1, 1], [], []>} : vector<8x8xf32>, vector<8x2xf32>, vector<8x2xf32> -> vector<8x2xf32>
    %59 = arith.addf %55, %58 : vector<8x2xf32>
    %c0_53 = arith.constant 0 : index
    %c2_54 = arith.constant 2 : index
    %c0_55 = arith.constant 0 : index
    %c0_56 = arith.constant 0 : index
    %60 = vector.load %arg2[%c0_53, %c2_54, %c0_55, %c0_56] : memref<1x4x8x8xf32, #tpu.memory_space<vmem>>, vector<1x1x8x8xf32>
    %61 = vector.shape_cast %60 : vector<1x1x8x8xf32> to vector<8x8xf32>
    %cst_57 = arith.constant dense<0.000000e+00> : vector<8x2xf32>
    %62 = tpu.matmul %61, %57, %cst_57 {dimension_numbers = #tpu.dot_dimension_numbers<[1], [0], [0], [1], [0, 0, 1, 1], [], []>} : vector<8x8xf32>, vector<8x2xf32>, vector<8x2xf32> -> vector<8x2xf32>
    %c0_58 = arith.constant 0 : index
    %c2_59 = arith.constant 2 : index
    %c0_60 = arith.constant 0 : index
    %c0_61 = arith.constant 0 : index
    %63 = vector.load %arg3[%c0_58, %c2_59, %c0_60, %c0_61] : memref<1x4x8x8xf32, #tpu.memory_space<vmem>>, vector<1x1x8x8xf32>
    %64 = vector.shape_cast %63 : vector<1x1x8x8xf32> to vector<8x8xf32>
    %cst_62 = arith.constant dense<0.000000e+00> : vector<8x2xf32>
    %65 = tpu.matmul %64, %59, %cst_62 {dimension_numbers = #tpu.dot_dimension_numbers<[1], [0], [0], [1], [0, 0, 1, 1], [], []>} : vector<8x8xf32>, vector<8x2xf32>, vector<8x2xf32> -> vector<8x2xf32>
    %66 = tpu.concatenate %62, %65 in 1 : vector<8x2xf32>, vector<8x2xf32> -> vector<8x4xf32>
    %67 = vector.extract_strided_slice %21 {offsets = [24, 0], sizes = [8, 2], strides = [1, 1]} : vector<32x4xf32> to vector<8x2xf32>
    %68 = vector.extract_strided_slice %21 {offsets = [24, 2], sizes = [8, 2], strides = [1, 1]} : vector<32x4xf32> to vector<8x2xf32>
    %c0_63 = arith.constant 0 : index
    %c3 = arith.constant 3 : index
    %c0_64 = arith.constant 0 : index
    %c0_65 = arith.constant 0 : index
    %69 = vector.load %arg1[%c0_63, %c3, %c0_64, %c0_65] : memref<1x4x8x2xf32, #tpu.memory_space<vmem>>, vector<1x1x8x2xf32>
    %70 = vector.shape_cast %69 : vector<1x1x8x2xf32> to vector<8x2xf32>
    %cst_66 = arith.constant dense<0.000000e+00> : vector<8x2xf32>
    %71 = tpu.matmul %7, %67, %cst_66 {dimension_numbers = #tpu.dot_dimension_numbers<[1], [0], [0], [1], [0, 0, 1, 1], [], []>} : vector<8x8xf32>, vector<8x2xf32>, vector<8x2xf32> -> vector<8x2xf32>
    %72 = arith.addf %70, %71 : vector<8x2xf32>
    %cst_67 = arith.constant dense<0.000000e+00> : vector<8x2xf32>
    %73 = tpu.matmul %11, %68, %cst_67 {dimension_numbers = #tpu.dot_dimension_numbers<[1], [0], [0], [1], [0, 0, 1, 1], [], []>} : vector<8x8xf32>, vector<8x2xf32>, vector<8x2xf32> -> vector<8x2xf32>
    %74 = arith.addf %70, %73 : vector<8x2xf32>
    %c0_68 = arith.constant 0 : index
    %c3_69 = arith.constant 3 : index
    %c0_70 = arith.constant 0 : index
    %c0_71 = arith.constant 0 : index
    %75 = vector.load %arg2[%c0_68, %c3_69, %c0_70, %c0_71] : memref<1x4x8x8xf32, #tpu.memory_space<vmem>>, vector<1x1x8x8xf32>
    %76 = vector.shape_cast %75 : vector<1x1x8x8xf32> to vector<8x8xf32>
    %cst_72 = arith.constant dense<0.000000e+00> : vector<8x2xf32>
    %77 = tpu.matmul %76, %72, %cst_72 {dimension_numbers = #tpu.dot_dimension_numbers<[1], [0], [0], [1], [0, 0, 1, 1], [], []>} : vector<8x8xf32>, vector<8x2xf32>, vector<8x2xf32> -> vector<8x2xf32>
    %c0_73 = arith.constant 0 : index
    %c3_74 = arith.constant 3 : index
    %c0_75 = arith.constant 0 : index
    %c0_76 = arith.constant 0 : index
    %78 = vector.load %arg3[%c0_73, %c3_74, %c0_75, %c0_76] : memref<1x4x8x8xf32, #tpu.memory_space<vmem>>, vector<1x1x8x8xf32>
    %79 = vector.shape_cast %78 : vector<1x1x8x8xf32> to vector<8x8xf32>
    %cst_77 = arith.constant dense<0.000000e+00> : vector<8x2xf32>
    %80 = tpu.matmul %79, %74, %cst_77 {dimension_numbers = #tpu.dot_dimension_numbers<[1], [0], [0], [1], [0, 0, 1, 1], [], []>} : vector<8x8xf32>, vector<8x2xf32>, vector<8x2xf32> -> vector<8x2xf32>
    %81 = tpu.concatenate %77, %80 in 1 : vector<8x2xf32>, vector<8x2xf32> -> vector<8x4xf32>
    %82 = tpu.concatenate %36, %51, %66, %81 in 0 : vector<8x4xf32>, vector<8x4xf32>, vector<8x4xf32>, vector<8x4xf32> -> vector<32x4xf32>
    %c0_78 = arith.constant 0 : index
    %c0_79 = arith.constant 0 : index
    %83 = vector.load %arg10[%c0_78, %c0_79] : memref<4x16xf32, #tpu.memory_space<vmem>>, vector<4x16xf32>
    %cst_80 = arith.constant dense<0.000000e+00> : vector<32x16xf32>
    %84 = tpu.matmul %82, %83, %cst_80 {dimension_numbers = #tpu.dot_dimension_numbers<[1], [0], [0], [1], [0, 0, 1, 1], [], []>} : vector<32x4xf32>, vector<4x16xf32>, vector<32x16xf32> -> vector<32x16xf32>
    %c0_81 = arith.constant 0 : index
    %c0_82 = arith.constant 0 : index
    %85 = memref.load %arg11[%c0_81, %c0_82] : memref<1x1xf32, #tpu.memory_space<smem>>
    %cst_83 = arith.constant 0.000000e+00 : f32
    %86 = vector.broadcast %cst_83 : f32 to vector<32x16xf32>
    %87 = arith.cmpf oge, %84, %86 : vector<32x16xf32>
    %88 = vector.broadcast %85 : f32 to vector<32x16xf32>
    %89 = arith.mulf %88, %84 : vector<32x16xf32>
    %90 = arith.select %87, %84, %89 : vector<32x16xi1>, vector<32x16xf32>
    %c0_84 = arith.constant 0 : index
    %c0_85 = arith.constant 0 : index
    %c0_86 = arith.constant 0 : index
    %91 = vector.load %arg12[%c0_84, %c0_85, %c0_86] : memref<1x32x16xf32, #tpu.memory_space<vmem>>, vector<1x32x16xf32>
    %92 = vector.shape_cast %91 : vector<1x32x16xf32> to vector<32x16xf32>
    %93 = vector.shape_cast %90 : vector<32x16xf32> to vector<1x32x16xf32>
    tpu.vector_store %arg12[%c0_84, %c0_85, %c0_86], %93 {strides = array<i32>} : memref<1x32x16xf32, #tpu.memory_space<vmem>>, vector<1x32x16xf32>,
    return
  }
  func.func @transform_0(%arg0: i32) -> (i32, i32, i32, i32) {
    %c0_i32 = arith.constant 0 : i32
    %c0_i32_0 = arith.constant 0 : i32
    %c0_i32_1 = arith.constant 0 : i32
    %c0_i32_2 = arith.constant 0 : i32
    return %arg0, %c0_i32, %c0_i32_0, %c0_i32_1 : i32, i32, i32, i32
  }
  func.func @transform_1(%arg0: i32) -> (i32, i32, i32, i32) {
    %c0_i32 = arith.constant 0 : i32
    %c0_i32_0 = arith.constant 0 : i32
    %c0_i32_1 = arith.constant 0 : i32
    %c0_i32_2 = arith.constant 0 : i32
    return %arg0, %c0_i32, %c0_i32_0, %c0_i32_1 : i32, i32, i32, i32
  }
  func.func @transform_2(%arg0: i32) -> (i32, i32, i32, i32) {
    %c0_i32 = arith.constant 0 : i32
    %c0_i32_0 = arith.constant 0 : i32
    %c0_i32_1 = arith.constant 0 : i32
    %c0_i32_2 = arith.constant 0 : i32
    return %arg0, %c0_i32, %c0_i32_0, %c0_i32_1 : i32, i32, i32, i32
  }
  func.func @transform_3(%arg0: i32) -> (i32, i32, i32) {
    %c0_i32 = arith.constant 0 : i32
    %c0_i32_0 = arith.constant 0 : i32
    %c0_i32_1 = arith.constant 0 : i32
    return %arg0, %c0_i32, %c0_i32_0 : i32, i32, i32
  }
  func.func @transform_4(%arg0: i32) -> (i32, i32, i32) {
    %c0_i32 = arith.constant 0 : i32
    %c0_i32_0 = arith.constant 0 : i32
    %c0_i32_1 = arith.constant 0 : i32
    return %arg0, %c0_i32, %c0_i32_0 : i32, i32, i32
  }
  func.func @transform_5(%arg0: i32) -> (i32, i32, i32) {
    %c0_i32 = arith.constant 0 : i32
    %c0_i32_0 = arith.constant 0 : i32
    %c0_i32_1 = arith.constant 0 : i32
    return %arg0, %c0_i32, %c0_i32_0 : i32, i32, i32
  }
  func.func @transform_6(%arg0: i32) -> (i32, i32, i32) {
    %c0_i32 = arith.constant 0 : i32
    %c0_i32_0 = arith.constant 0 : i32
    %c0_i32_1 = arith.constant 0 : i32
    return %arg0, %c0_i32, %c0_i32_0 : i32, i32, i32
  }
  func.func @transform_7(%arg0: i32) -> (i32, i32) {
    %c0_i32 = arith.constant 0 : i32
    %c0_i32_0 = arith.constant 0 : i32
    %c0_i32_1 = arith.constant 0 : i32
    return %c0_i32, %c0_i32_0 : i32, i32
  }
  func.func @transform_8(%arg0: i32) -> (i32, i32) {
    %c0_i32 = arith.constant 0 : i32
    %c0_i32_0 = arith.constant 0 : i32
    %c0_i32_1 = arith.constant 0 : i32
    return %c0_i32, %c0_i32_0 : i32, i32
  }
  func.func @transform_9(%arg0: i32) -> (i32, i32) {
    %c0_i32 = arith.constant 0 : i32
    %c0_i32_0 = arith.constant 0 : i32
    %c0_i32_1 = arith.constant 0 : i32
    return %c0_i32, %c0_i32_0 : i32, i32
  }
  func.func @transform_10(%arg0: i32) -> (i32, i32) {
    %c0_i32 = arith.constant 0 : i32
    %c0_i32_0 = arith.constant 0 : i32
    %c0_i32_1 = arith.constant 0 : i32
    return %c0_i32, %c0_i32_0 : i32, i32
  }
  func.func @transform_11(%arg0: i32) -> (i32, i32, i32) {
    %c0_i32 = arith.constant 0 : i32
    %c0_i32_0 = arith.constant 0 : i32
    %c0_i32_1 = arith.constant 0 : i32
    return %arg0, %c0_i32, %c0_i32_0 : i32, i32, i32
  }
}

</mosaic_0001>

<llo_original>
// kernel: tpu_custom_call.1
$region0: #{tpu_custom_call.1}
  #allocation0 [shape = 'u32[]', space=smem, size = 0x4, offset = 0x4, fixed_abs, tag = 'smem constant byte address 0x4 - core index']
  #allocation1 [shape = 'u32[144,128]{1,0:T(1,128)}', space=vmem, size = 0x12000, scoped, tag = 'internal scratch']
  #allocation2 [shape = 'f32[1,1]{1,0:T(1,128)S(6)}', space=smem, size = 0x200, scoped, tag = 'scoped memory for tpu_custom_call.1']
  %s0 = inlined_call_operand.vmem [shape: f32[2,4,8,2], index: 0, kind: input, shape index: {}]
  %s1 = inlined_call_operand.vmem [shape: f32[2,4,8,8], index: 1, kind: input, shape index: {}]
  %s2 = inlined_call_operand.vmem [shape: f32[2,4,8,8], index: 2, kind: input, shape index: {}]
  %s3 = inlined_call_operand.vmem [shape: f32[2,8,8], index: 3, kind: input, shape index: {}]
  %s4 = inlined_call_operand.vmem [shape: f32[2,8,8], index: 4, kind: input, shape index: {}]
  %s5 = inlined_call_operand.vmem [shape: f32[2,32,16], index: 5, kind: input, shape index: {}]
  %s6 = inlined_call_operand.vmem [shape: f32[2,32,16], index: 6, kind: input, shape index: {}]
  %s7 = inlined_call_operand.vmem [shape: f32[32,4], index: 7, kind: input, shape index: {}]
  %s8 = inlined_call_operand.vmem [shape: f32[1,4], index: 8, kind: input, shape index: {}]
  %s9 = inlined_call_operand.vmem [shape: f32[4,16], index: 9, kind: input, shape index: {}]
  %s10 = inlined_call_operand.<no memory space> [shape: f32[1,1], index: 10, kind: input, shape index: {}]
  %s11 = inlined_call_operand.vmem [shape: f32[2,32,16], index: 11, kind: output, shape index: {}]
  %s12 = sld [smem:[#allocation0]]
  $region77: #{tpu_custom_call.1} parent=0
    _
  %s14 = ssub.s32 1, %s12
  %s15 = scalar_select 0, %s14, %s12
  %16 = sst [smem:[#allocation2]] %s10
  loop: start=0, step=1, limit=4
  $region2: #{tpu_custom_call.1} parent=0 // loop_pre_header
    _
  $region3: #{tpu_custom_call.1} parent=0 // loop_header
    %s18 = sphi 0, %s22
    %p19 = scmp.ge.s32.totalorder %s18, 4
    %s28 = sphi 0, %s30
    %s31 = sphi 0, %s28
    %s32 = sphi 0, %s31
    %s48 = sphi 0, %s32
    %s54 = sphi 0, %s56
    %s57 = sphi 0, %s54
    %s58 = sphi 0, %s57
    %s74 = sphi 0, %s58
    %s80 = sphi 0, %s82
    %s83 = sphi 0, %s80
    %s84 = sphi 0, %s83
    %s100 = sphi 0, %s84
    %s106 = sphi 0, %s108
    %s109 = sphi 0, %s106
    %s110 = sphi 0, %s109
    %s126 = sphi 0, %s110
    %s132 = sphi 0, %s134
    %s135 = sphi 0, %s132
    %s136 = sphi 0, %s135
    %s152 = sphi 0, %s136
    %s158 = sphi 0, %s160
    %s161 = sphi 0, %s158
    %s162 = sphi 0, %s161
    %s178 = sphi 0, %s162
    %s184 = sphi 0, %s186
    %s187 = sphi 0, %s184
    %s188 = sphi 0, %s187
    %s204 = sphi 0, %s188
    %s208 = sphi 0, %s208
    %s210 = sphi 0, %s208
    %s211 = sphi 0, %s210
    %s225 = sphi 0, %s211
    %s229 = sphi 0, %s229
    %s231 = sphi 0, %s229
    %s232 = sphi 0, %s231
    %s246 = sphi 0, %s232
    %s250 = sphi 0, %s250
    %s252 = sphi 0, %s250
    %s253 = sphi 0, %s252
    %s267 = sphi 0, %s253
    %s271 = sphi 0, %s271
    %s273 = sphi 0, %s271
    %s274 = sphi 0, %s273
    %s288 = sphi 0, %s274
    %s294 = sphi 0, %s296
    %s297 = sphi 0, %s294
    %s298 = sphi 0, %s297
    %s314 = sphi 0, %s298
  $region4: #{tpu_custom_call.1} parent=0 // loop_header_branch
    %21 = sbr.rel (%p19) target = $region8
  $region5: #{tpu_custom_call.1} parent=0 // loop_body
    %s23 = ssub.s32 %s18, 1
    %s24 = ssub.s32 %s18, 2
    %s25 = sadd.s32 %s18, 1
    %s26 = ssub.s32 %s18, %s25
    %p27 = scmp.eq.s32.totalorder %s26, 0
    %s29 = sadd.s32 %s28, 1
    %s30 = scalar_select %p27, %s28, %s29
    %p33 = pneg %p27
    %p34 = scmp.eq.s32.totalorder %s18, 1
    %p35 = por %p33, %p34
    %p36 = scmp.ne.s32.totalorder %s28, %s31
    %p37 = scmp.eq.s32.totalorder %s18, 0
    %p38 = por %p36, %p37
    %p39 = scmp.ne.s32.totalorder %s28, %s31
    %p40 = scmp.eq.s32.totalorder %s23, 1
    %p41 = por %p39, %p40
    %p42 = scmp.ne.s32.totalorder %s31, %s32
    %p43 = scmp.eq.s32.totalorder %s23, 0
    %p44 = por %p42, %p43
    %p45 = scmp.ne.s32.totalorder %s31, %s32
    %p46 = scmp.eq.s32.totalorder %s24, 1
    %p47 = por %p45, %p46
    %p49 = scmp.ne.s32.totalorder %s32, %s48
    %p50 = scmp.eq.s32.totalorder %s24, 0
    %p51 = por %p49, %p50
    %s52 = ssub.s32 %s18, %s25
    %p53 = scmp.eq.s32.totalorder %s52, 0
    %s55 = sadd.s32 %s54, 1
    %s56 = scalar_select %p53, %s54, %s55
    %p59 = pneg %p53
    %p60 = scmp.eq.s32.totalorder %s18, 1
    %p61 = por %p59, %p60
    %p62 = scmp.ne.s32.totalorder %s54, %s57
    %p63 = scmp.eq.s32.totalorder %s18, 0
    %p64 = por %p62, %p63
    %p65 = scmp.ne.s32.totalorder %s54, %s57
    %p66 = scmp.eq.s32.totalorder %s23, 1
    %p67 = por %p65, %p66
    %p68 = scmp.ne.s32.totalorder %s57, %s58
    %p69 = scmp.eq.s32.totalorder %s23, 0
    %p70 = por %p68, %p69
    %p71 = scmp.ne.s32.totalorder %s57, %s58
    %p72 = scmp.eq.s32.totalorder %s24, 1
    %p73 = por %p71, %p72
    %p75 = scmp.ne.s32.totalorder %s58, %s74
    %p76 = scmp.eq.s32.totalorder %s24, 0
    %p77 = por %p75, %p76
    %s78 = ssub.s32 %s18, %s25
    %p79 = scmp.eq.s32.totalorder %s78, 0
    %s81 = sadd.s32 %s80, 1
    %s82 = scalar_select %p79, %s80, %s81
    %p85 = pneg %p79
    %p86 = scmp.eq.s32.totalorder %s18, 1
    %p87 = por %p85, %p86
    %p88 = scmp.ne.s32.totalorder %s80, %s83
    %p89 = scmp.eq.s32.totalorder %s18, 0
    %p90 = por %p88, %p89
    %p91 = scmp.ne.s32.totalorder %s80, %s83
    %p92 = scmp.eq.s32.totalorder %s23, 1
    %p93 = por %p91, %p92
    %p94 = scmp.ne.s32.totalorder %s83, %s84
    %p95 = scmp.eq.s32.totalorder %s23, 0
    %p96 = por %p94, %p95
    %p97 = scmp.ne.s32.totalorder %s83, %s84
    %p98 = scmp.eq.s32.totalorder %s24, 1
    %p99 = por %p97, %p98
    %p101 = scmp.ne.s32.totalorder %s84, %s100
    %p102 = scmp.eq.s32.totalorder %s24, 0
    %p103 = por %p101, %p102
    %s104 = ssub.s32 %s18, %s25
    %p105 = scmp.eq.s32.totalorder %s104, 0
    %s107 = sadd.s32 %s106, 1
    %s108 = scalar_select %p105, %s106, %s107
    %p111 = pneg %p105
    %p112 = scmp.eq.s32.totalorder %s18, 1
    %p113 = por %p111, %p112
    %p114 = scmp.ne.s32.totalorder %s106, %s109
    %p115 = scmp.eq.s32.totalorder %s18, 0
    %p116 = por %p114, %p115
    %p117 = scmp.ne.s32.totalorder %s106, %s109
    %p118 = scmp.eq.s32.totalorder %s23, 1
    %p119 = por %p117, %p118
    %p120 = scmp.ne.s32.totalorder %s109, %s110
    %p121 = scmp.eq.s32.totalorder %s23, 0
    %p122 = por %p120, %p121
    %p123 = scmp.ne.s32.totalorder %s109, %s110
    %p124 = scmp.eq.s32.totalorder %s24, 1
    %p125 = por %p123, %p124
    %p127 = scmp.ne.s32.totalorder %s110, %s126
    %p128 = scmp.eq.s32.totalorder %s24, 0
    %p129 = por %p127, %p128
    %s130 = ssub.s32 %s18, %s25
    %p131 = scmp.eq.s32.totalorder %s130, 0
    %s133 = sadd.s32 %s132, 1
    %s134 = scalar_select %p131, %s132, %s133
    %p137 = pneg %p131
    %p138 = scmp.eq.s32.totalorder %s18, 1
    %p139 = por %p137, %p138
    %p140 = scmp.ne.s32.totalorder %s132, %s135
    %p141 = scmp.eq.s32.totalorder %s18, 0
    %p142 = por %p140, %p141
    %p143 = scmp.ne.s32.totalorder %s132, %s135
    %p144 = scmp.eq.s32.totalorder %s23, 1
    %p145 = por %p143, %p144
    %p146 = scmp.ne.s32.totalorder %s135, %s136
    %p147 = scmp.eq.s32.totalorder %s23, 0
    %p148 = por %p146, %p147
    %p149 = scmp.ne.s32.totalorder %s135, %s136
    %p150 = scmp.eq.s32.totalorder %s24, 1
    %p151 = por %p149, %p150
    %p153 = scmp.ne.s32.totalorder %s136, %s152
    %p154 = scmp.eq.s32.totalorder %s24, 0
    %p155 = por %p153, %p154
    %s156 = ssub.s32 %s18, %s25
    %p157 = scmp.eq.s32.totalorder %s156, 0
    %s159 = sadd.s32 %s158, 1
    %s160 = scalar_select %p157, %s158, %s159
    %p163 = pneg %p157
    %p164 = scmp.eq.s32.totalorder %s18, 1
    %p165 = por %p163, %p164
    %p166 = scmp.ne.s32.totalorder %s158, %s161
    %p167 = scmp.eq.s32.totalorder %s18, 0
    %p168 = por %p166, %p167
    %p169 = scmp.ne.s32.totalorder %s158, %s161
    %p170 = scmp.eq.s32.totalorder %s23, 1
    %p171 = por %p169, %p170
    %p172 = scmp.ne.s32.totalorder %s161, %s162
    %p173 = scmp.eq.s32.totalorder %s23, 0
    %p174 = por %p172, %p173
    %p175 = scmp.ne.s32.totalorder %s161, %s162
    %p176 = scmp.eq.s32.totalorder %s24, 1
    %p177 = por %p175, %p176
    %p179 = scmp.ne.s32.totalorder %s162, %s178
    %p180 = scmp.eq.s32.totalorder %s24, 0
    %p181 = por %p179, %p180
    %s182 = ssub.s32 %s18, %s25
    %p183 = scmp.eq.s32.totalorder %s182, 0
    %s185 = sadd.s32 %s184, 1
    %s186 = scalar_select %p183, %s184, %s185
    %p189 = pneg %p183
    %p190 = scmp.eq.s32.totalorder %s18, 1
    %p191 = por %p189, %p190
    %p192 = scmp.ne.s32.totalorder %s184, %s187
    %p193 = scmp.eq.s32.totalorder %s18, 0
    %p194 = por %p192, %p193
    %p195 = scmp.ne.s32.totalorder %s184, %s187
    %p196 = scmp.eq.s32.totalorder %s23, 1
    %p197 = por %p195, %p196
    %p198 = scmp.ne.s32.totalorder %s187, %s188
    %p199 = scmp.eq.s32.totalorder %s23, 0
    %p200 = por %p198, %p199
    %p201 = scmp.ne.s32.totalorder %s187, %s188
    %p202 = scmp.eq.s32.totalorder %s24, 1
    %p203 = por %p201, %p202
    %p205 = scmp.ne.s32.totalorder %s188, %s204
    %p206 = scmp.eq.s32.totalorder %s24, 0
    %p207 = por %p205, %p206
    %s209 = sadd.s32 %s208, 1
    %p212 = scmp.eq.s32.totalorder %s18, 1
    %p213 = scmp.ne.s32.totalorder %s208, %s210
    %p214 = scmp.eq.s32.totalorder %s18, 0
    %p215 = por %p213, %p214
    %p216 = scmp.ne.s32.totalorder %s208, %s210
    %p217 = scmp.eq.s32.totalorder %s23, 1
    %p218 = por %p216, %p217
    %p219 = scmp.ne.s32.totalorder %s210, %s211
    %p220 = scmp.eq.s32.totalorder %s23, 0
    %p221 = por %p219, %p220
    %p222 = scmp.ne.s32.totalorder %s210, %s211
    %p223 = scmp.eq.s32.totalorder %s24, 1
    %p224 = por %p222, %p223
    %p226 = scmp.ne.s32.totalorder %s211, %s225
    %p227 = scmp.eq.s32.totalorder %s24, 0
    %p228 = por %p226, %p227
    %s230 = sadd.s32 %s229, 1
    %p233 = scmp.eq.s32.totalorder %s18, 1
    %p234 = scmp.ne.s32.totalorder %s229, %s231
    %p235 = scmp.eq.s32.totalorder %s18, 0
    %p236 = por %p234, %p235
    %p237 = scmp.ne.s32.totalorder %s229, %s231
    %p238 = scmp.eq.s32.totalorder %s23, 1
    %p239 = por %p237, %p238
    %p240 = scmp.ne.s32.totalorder %s231, %s232
    %p241 = scmp.eq.s32.totalorder %s23, 0
    %p242 = por %p240, %p241
    %p243 = scmp.ne.s32.totalorder %s231, %s232
    %p244 = scmp.eq.s32.totalorder %s24, 1
    %p245 = por %p243, %p244
    %p247 = scmp.ne.s32.totalorder %s232, %s246
    %p248 = scmp.eq.s32.totalorder %s24, 0
    %p249 = por %p247, %p248
    %s251 = sadd.s32 %s250, 1
    %p254 = scmp.eq.s32.totalorder %s18, 1
    %p255 = scmp.ne.s32.totalorder %s250, %s252
    %p256 = scmp.eq.s32.totalorder %s18, 0
    %p257 = por %p255, %p256
    %p258 = scmp.ne.s32.totalorder %s250, %s252
    %p259 = scmp.eq.s32.totalorder %s23, 1
    %p260 = por %p258, %p259
    %p261 = scmp.ne.s32.totalorder %s252, %s253
    %p262 = scmp.eq.s32.totalorder %s23, 0
    %p263 = por %p261, %p262
    %p264 = scmp.ne.s32.totalorder %s252, %s253
    %p265 = scmp.eq.s32.totalorder %s24, 1
    %p266 = por %p264, %p265
    %p268 = scmp.ne.s32.totalorder %s253, %s267
    %p269 = scmp.eq.s32.totalorder %s24, 0
    %p270 = por %p268, %p269
    %s272 = sadd.s32 %s271, 1
    %p275 = scmp.eq.s32.totalorder %s18, 1
    %p276 = scmp.ne.s32.totalorder %s271, %s273
    %p277 = scmp.eq.s32.totalorder %s18, 0
    %p278 = por %p276, %p277
    %p279 = scmp.ne.s32.totalorder %s271, %s273
    %p280 = scmp.eq.s32.totalorder %s23, 1
    %p281 = por %p279, %p280
    %p282 = scmp.ne.s32.totalorder %s273, %s274
    %p283 = scmp.eq.s32.totalorder %s23, 0
    %p284 = por %p282, %p283
    %p285 = scmp.ne.s32.totalorder %s273, %s274
    %p286 = scmp.eq.s32.totalorder %s24, 1
    %p287 = por %p285, %p286
    %p289 = scmp.ne.s32.totalorder %s274, %s288
    %p290 = scmp.eq.s32.totalorder %s24, 0
    %p291 = por %p289, %p290
    %s292 = ssub.s32 %s18, %s25
    %p293 = scmp.eq.s32.totalorder %s292, 0
    %s295 = sadd.s32 %s294, 1
    %s296 = scalar_select %p293, %s294, %s295
    %p299 = pneg %p293
    %p300 = scmp.eq.s32.totalorder %s18, 1
    %p301 = por %p299, %p300
    %p302 = scmp.ne.s32.totalorder %s294, %s297
    %p303 = scmp.eq.s32.totalorder %s18, 0
    %p304 = por %p302, %p303
    %p305 = scmp.ne.s32.totalorder %s294, %s297
    %p306 = scmp.eq.s32.totalorder %s23, 1
    %p307 = por %p305, %p306
    %p308 = scmp.ne.s32.totalorder %s297, %s298
    %p309 = scmp.eq.s32.totalorder %s23, 0
    %p310 = por %p308, %p309
    %p311 = scmp.ne.s32.totalorder %s297, %s298
    %p312 = scmp.eq.s32.totalorder %s24, 1
    %p313 = por %p311, %p312
    %p315 = scmp.ne.s32.totalorder %s298, %s314
    %p316 = scmp.eq.s32.totalorder %s24, 0
    %p317 = por %p315, %p316
    %p318 = scmp.le.s32.totalorder 1, %s18
    %p319 = scmp.lt.s32.totalorder %s18, 3
    %p320 = pnand %p318, %p319
    %p321 = pneg %p320
    // Predicated region
    $region9: #{tpu_custom_call.1} parent=5 // pred_check
      _
    $region10: #{tpu_custom_call.1} parent=5 // pred_check_branch
      %323 = sbr.rel (%p320) target = $region12
    $region11: #{tpu_custom_call.1} parent=5 // pred_region
      %s324 = ssub.s32 %s18, 1
      // Predicated region
      $region13: #{tpu_custom_call.1} parent=11 // pred_check
        %p325 = pneg %p221
      $region14: #{tpu_custom_call.1} parent=11 // pred_check_branch
        %327 = sbr.rel (%p325) target = $region16
      $region15: #{tpu_custom_call.1} parent=11 // pred_region
        _
      $region16: #{tpu_custom_call.1} parent=11 // pred_fallthru
        _
      // Predicated region
      $region17: #{tpu_custom_call.1} parent=11 // pred_check
        %p328 = pneg %p242
      $region18: #{tpu_custom_call.1} parent=11 // pred_check_branch
        %330 = sbr.rel (%p328) target = $region20
      $region19: #{tpu_custom_call.1} parent=11 // pred_region
        _
      $region20: #{tpu_custom_call.1} parent=11 // pred_fallthru
        _
      // Predicated region
      $region21: #{tpu_custom_call.1} parent=11 // pred_check
        %p331 = pneg %p263
      $region22: #{tpu_custom_call.1} parent=11 // pred_check_branch
        %333 = sbr.rel (%p331) target = $region24
      $region23: #{tpu_custom_call.1} parent=11 // pred_region
        _
      $region24: #{tpu_custom_call.1} parent=11 // pred_fallthru
        _
      // Predicated region
      $region25: #{tpu_custom_call.1} parent=11 // pred_check
        %p334 = pneg %p284
      $region26: #{tpu_custom_call.1} parent=11 // pred_check_branch
        %336 = sbr.rel (%p334) target = $region28
      $region27: #{tpu_custom_call.1} parent=11 // pred_region
        _
      $region28: #{tpu_custom_call.1} parent=11 // pred_fallthru
        _
    $region12: #{tpu_custom_call.1} parent=5 // pred_fallthru
      _
    %p337 = scmp.lt.s32.totalorder %s18, 2
    // Predicated region
    $region29: #{tpu_custom_call.1} parent=5 // pred_check
      %p338 = pneg %p337
    $region30: #{tpu_custom_call.1} parent=5 // pred_check_branch
      %340 = sbr.rel (%p338) target = $region32
    $region31: #{tpu_custom_call.1} parent=5 // pred_region
      // Predicated region
      $region33: #{tpu_custom_call.1} parent=31 // pred_check
        %p341 = pneg %p38
      $region34: #{tpu_custom_call.1} parent=31 // pred_check_branch
        %343 = sbr.rel (%p341) target = $region36
      $region35: #{tpu_custom_call.1} parent=31 // pred_region
        %p344 = scmp.lt.s32.totalorder %s18, 1
        %s345 = scalar_select %p344, %s18, 1
        %s346 = smul.addr %s345, 4
        %s347 = smul.addr %s346, 8
        %s348 = scalar_lea.vmem %s0, %s347
      $region36: #{tpu_custom_call.1} parent=31 // pred_fallthru
        _
      // Predicated region
      $region37: #{tpu_custom_call.1} parent=31 // pred_check
        %p349 = pneg %p64
      $region38: #{tpu_custom_call.1} parent=31 // pred_check_branch
        %351 = sbr.rel (%p349) target = $region40
      $region39: #{tpu_custom_call.1} parent=31 // pred_region
        %p352 = scmp.lt.s32.totalorder %s18, 1
        %s353 = scalar_select %p352, %s18, 1
        %s354 = smul.addr %s353, 4
        %s355 = smul.addr %s354, 8
        %s356 = scalar_lea.vmem %s1, %s355
      $region40: #{tpu_custom_call.1} parent=31 // pred_fallthru
        _
      // Predicated region
      $region41: #{tpu_custom_call.1} parent=31 // pred_check
        %p357 = pneg %p90
      $region42: #{tpu_custom_call.1} parent=31 // pred_check_branch
        %359 = sbr.rel (%p357) target = $region44
      $region43: #{tpu_custom_call.1} parent=31 // pred_region
        %p360 = scmp.lt.s32.totalorder %s18, 1
        %s361 = scalar_select %p360, %s18, 1
        %s362 = smul.addr %s361, 4
        %s363 = smul.addr %s362, 8
        %s364 = scalar_lea.vmem %s2, %s363
      $region44: #{tpu_custom_call.1} parent=31 // pred_fallthru
        _
      // Predicated region
      $region45: #{tpu_custom_call.1} parent=31 // pred_check
        %p365 = pneg %p116
      $region46: #{tpu_custom_call.1} parent=31 // pred_check_branch
        %367 = sbr.rel (%p365) target = $region48
      $region47: #{tpu_custom_call.1} parent=31 // pred_region
        %p368 = scmp.lt.s32.totalorder %s18, 1
        %s369 = scalar_select %p368, %s18, 1
        %s370 = smul.addr %s369, 8
        %s371 = scalar_lea.vmem %s3, %s370
      $region48: #{tpu_custom_call.1} parent=31 // pred_fallthru
        _
      // Predicated region
      $region49: #{tpu_custom_call.1} parent=31 // pred_check
        %p372 = pneg %p142
      $region50: #{tpu_custom_call.1} parent=31 // pred_check_branch
        %374 = sbr.rel (%p372) target = $region52
      $region51: #{tpu_custom_call.1} parent=31 // pred_region
        %p375 = scmp.lt.s32.totalorder %s18, 1
        %s376 = scalar_select %p375, %s18, 1
        %s377 = smul.addr %s376, 8
        %s378 = scalar_lea.vmem %s4, %s377
      $region52: #{tpu_custom_call.1} parent=31 // pred_fallthru
        _
      // Predicated region
      $region53: #{tpu_custom_call.1} parent=31 // pred_check
        %p379 = pneg %p168
      $region54: #{tpu_custom_call.1} parent=31 // pred_check_branch
        %381 = sbr.rel (%p379) target = $region56
      $region55: #{tpu_custom_call.1} parent=31 // pred_region
        %p382 = scmp.lt.s32.totalorder %s18, 1
        %s383 = scalar_select %p382, %s18, 1
        %s384 = smul.addr %s383, 4
        %s385 = smul.addr %s384, 8
        %s386 = scalar_lea.vmem %s5, %s385
      $region56: #{tpu_custom_call.1} parent=31 // pred_fallthru
        _
      // Predicated region
      $region57: #{tpu_custom_call.1} parent=31 // pred_check
        %p387 = pneg %p194
      $region58: #{tpu_custom_call.1} parent=31 // pred_check_branch
        %389 = sbr.rel (%p387) target = $region60
      $region59: #{tpu_custom_call.1} parent=31 // pred_region
        %p390 = scmp.lt.s32.totalorder %s18, 1
        %s391 = scalar_select %p390, %s18, 1
        %s392 = smul.addr %s391, 4
        %s393 = smul.addr %s392, 8
        %s394 = scalar_lea.vmem %s6, %s393
      $region60: #{tpu_custom_call.1} parent=31 // pred_fallthru
        _
    $region32: #{tpu_custom_call.1} parent=5 // pred_fallthru
      _
    %p395 = scmp.le.s32.totalorder 1, %s18
    %p396 = scmp.lt.s32.totalorder %s18, 3
    %p397 = pnand %p395, %p396
    %p398 = pneg %p397
    // Predicated region
    $region61: #{tpu_custom_call.1} parent=5 // pred_check
      _
    $region62: #{tpu_custom_call.1} parent=5 // pred_check_branch
      %400 = sbr.rel (%p397) target = $region64
    $region63: #{tpu_custom_call.1} parent=5 // pred_region
      %s401 = ssub.s32 %s18, 1
      %p402 = scmp.lt.s32.totalorder %s23, 1
      %s403 = scalar_select %p402, %s23, 1
      %s404 = smul.addr %s403, 4
      %s405 = smul.addr %s404, 8
      %s406 = scalar_lea.vmem %s0, %s405
      %p407 = pneg %p44
      %p408 = pneg %p41
      %p409 = scmp.lt.s32.totalorder %s23, 1
      %s410 = scalar_select %p409, %s23, 1
      %s411 = smul.addr %s410, 4
      %s412 = smul.addr %s411, 8
      %s413 = scalar_lea.vmem %s1, %s412
      %p414 = pneg %p70
      %p415 = pneg %p67
      %p416 = scmp.lt.s32.totalorder %s23, 1
      %s417 = scalar_select %p416, %s23, 1
      %s418 = smul.addr %s417, 4
      %s419 = smul.addr %s418, 8
      %s420 = scalar_lea.vmem %s2, %s419
      %p421 = pneg %p96
      %p422 = pneg %p93
      %p423 = scmp.lt.s32.totalorder %s23, 1
      %s424 = scalar_select %p423, %s23, 1
      %s425 = smul.addr %s424, 8
      %s426 = scalar_lea.vmem %s3, %s425
      %p427 = pneg %p122
      %p428 = pneg %p119
      %p429 = scmp.lt.s32.totalorder %s23, 1
      %s430 = scalar_select %p429, %s23, 1
      %s431 = smul.addr %s430, 8
      %s432 = scalar_lea.vmem %s4, %s431
      %p433 = pneg %p148
      %p434 = pneg %p145
      %p435 = scmp.lt.s32.totalorder %s23, 1
      %s436 = scalar_select %p435, %s23, 1
      %s437 = smul.addr %s436, 4
      %s438 = smul.addr %s437, 8
      %s439 = scalar_lea.vmem %s5, %s438
      %p440 = pneg %p174
      %p441 = pneg %p171
      %p442 = scmp.lt.s32.totalorder %s23, 1
      %s443 = scalar_select %p442, %s23, 1
      %s444 = smul.addr %s443, 4
      %s445 = smul.addr %s444, 8
      %s446 = scalar_lea.vmem %s6, %s445
      %p447 = pneg %p200
      %p448 = pneg %p197
      %p449 = pneg %p221
      %p450 = pneg %p218
      %p451 = pneg %p242
      %p452 = pneg %p239
      %p453 = pneg %p263
      %p454 = pneg %p260
      %p455 = pneg %p284
      %p456 = pneg %p281
      %p457 = pneg %p310
      %p458 = pneg %p307
      %p459 = scmp.lt.s32.totalorder %s23, 1
      %s460 = scalar_select %p459, %s23, 1
      %s461 = smul.addr %s460, 4
      %s462 = smul.addr %s461, 8
      %s463 = scalar_lea.vmem %s11, %s462
      %p464 = scmp.lt.s32.totalorder %s23, 1
      %s465 = scalar_select %p464, %s23, 1
      %s466 = smul.addr %s465, 4
      %s467 = smul.addr %s466, 8
      %s468 = scalar_lea.vmem %s0, %s467
      %p469 = scmp.lt.s32.totalorder %s23, 1
      %s470 = scalar_select %p469, %s23, 1
      %s471 = smul.addr %s470, 4
      %s472 = smul.addr %s471, 8
      %s473 = scalar_lea.vmem %s1, %s472
      %p474 = scmp.lt.s32.totalorder %s23, 1
      %s475 = scalar_select %p474, %s23, 1
      %s476 = smul.addr %s475, 4
      %s477 = smul.addr %s476, 8
      %s478 = scalar_lea.vmem %s2, %s477
      %p479 = scmp.lt.s32.totalorder %s23, 1
      %s480 = scalar_select %p479, %s23, 1
      %s481 = smul.addr %s480, 8
      %s482 = scalar_lea.vmem %s3, %s481
      %p483 = scmp.lt.s32.totalorder %s23, 1
      %s484 = scalar_select %p483, %s23, 1
      %s485 = smul.addr %s484, 8
      %s486 = scalar_lea.vmem %s4, %s485
      %p487 = scmp.lt.s32.totalorder %s23, 1
      %s488 = scalar_select %p487, %s23, 1
      %s489 = smul.addr %s488, 4
      %s490 = smul.addr %s489, 8
      %s491 = scalar_lea.vmem %s5, %s490
      %p492 = scmp.lt.s32.totalorder %s23, 1
      %s493 = scalar_select %p492, %s23, 1
      %s494 = smul.addr %s493, 4
      %s495 = smul.addr %s494, 8
      %s496 = scalar_lea.vmem %s6, %s495
      %p497 = scmp.lt.s32.totalorder %s23, 1
      %s498 = scalar_select %p497, %s23, 1
      %s499 = smul.addr %s498, 4
      %s500 = smul.addr %s499, 8
      %s501 = scalar_lea.vmem %s11, %s500
      %v502 = vld [vmem:[%s482] sm:$0xff]
      %v503 = vld [vmem:[%s486] sm:$0xff]
      %vm504 = vcmask 64512
      %v505 = vsel %vm504, %v502, 0.0
      %506 = vadd.xlane.f32.xlu0 %v505
      %v507 = vpop.xlane.xlu0 %506
      %v508 = vrcp.pop %v507
      %v509 = vmul.f32 %v502, %v508
      %v510 = vsel %vm504, %v503, 0.0
      %511 = vadd.xlane.f32.xlu0 %v510
      %v512 = vpop.xlane.xlu0 %511
      %v513 = vrcp.pop %v512
      %v514 = vmul.f32 %v503, %v513
      %v515 = vld [vmem:[%s491] sm:$0xff]
      %v516 = vld [vmem:[%s491 + $0x8] sm:$0xff]
      %v517 = vld [vmem:[%s491 + $0x10] sm:$0xff]
      %v518 = vld [vmem:[%s491 + $0x18] sm:$0xff]
      %v519 = vld [vmem:[%s496] sm:$0xff]
      %v520 = vld [vmem:[%s496 + $0x8] sm:$0xff]
      %v521 = vld [vmem:[%s496 + $0x10] sm:$0xff]
      %v522 = vld [vmem:[%s496 + $0x18] sm:$0xff]
      %527 = vrot.lane.b32.xlu0 %v519, 16
      %v528 = vpop.permute.xlu0 %527
      %529 = vrot.lane.b32.xlu0 %v520, 16
      %v530 = vpop.permute.xlu0 %529
      %531 = vrot.lane.b32.xlu0 %v521, 16
      %v532 = vpop.permute.xlu0 %531
      %533 = vrot.lane.b32.xlu0 %v522, 16
      %v534 = vpop.permute.xlu0 %533
      %vm539 = vcmask 130048
      %v540 = vsel %vm539, %v515, %v528
      %v541 = vsel %vm539, %v516, %v530
      %v542 = vsel %vm539, %v517, %v532
      %v543 = vsel %vm539, %v518, %v534
      %v544 = vld [vmem:[%s7] sm:$0xff]
      %v545 = vld [vmem:[%s7 + $0x8] sm:$0xff]
      %v546 = vld [vmem:[%s7 + $0x10] sm:$0xff]
      %v547 = vld [vmem:[%s7 + $0x18] sm:$0xff]
      %v548 = vld [vmem:[%s8] sm:$0x1]
      %v550 = vlaneseq
      %v551 = vshrl.u32 %v550, 7
      %v552 = vsub.s32 0, %v551
      %v553 = vrot.slane %v548, %v552
      %vm555 = vcmask 261120
      %v557 = vsel %vm555, %v540, 0
      %v560 = vsel %vm555, %v541, 0
      %v563 = vsel %vm555, %v542, 0
      %v566 = vsel %vm555, %v543, 0
      %568 = vmatprep.subr.mxu0 0.0
      %569 = vmatpush1.msra.mxu0 0.0
      %570 = vmatprep.subr.mxu0 0.0
      %571 = vmatpush1.msra.mxu0 0.0
      %572 = vmatprep.subr.mxu0 0.0
      %573 = vmatpush1.msra.mxu0 0.0
      %574 = vmatprep.subr.mxu0 0.0
      %575 = vmatpush1.msra.mxu0 0.0
      %576 = vmatprep.subr.mxu0 0.0
      %577 = vmatpush1.msra.mxu0 0.0
      %578 = vmatprep.subr.mxu0 0.0
      %579 = vmatpush1.msra.mxu0 0.0
      %580 = vmatprep.subr.mxu0 0.0
      %581 = vmatpush1.msra.mxu0 0.0
      %582 = vmatprep.subr.mxu0 0.0
      %583 = vmatpush1.msra.mxu0 0.0
      %584 = vmatprep.subr.mxu0 0.0
      %585 = vmatpush1.msra.mxu0 0.0
      %586 = vmatprep.subr.mxu0 0.0
      %587 = vmatpush1.msra.mxu0 0.0
      %588 = vmatprep.subr.mxu0 0.0
      %589 = vmatpush1.msra.mxu0 0.0
      %590 = vmatprep.subr.mxu0 0.0
      %591 = vmatpush1.msra.mxu0 0.0
      %592 = vmatprep.subr.mxu0 0.0
      %593 = vmatpush1.msra.mxu0 %v547
      %594 = vmatprep.subr.mxu0 0.0
      %595 = vmatpush1.msra.mxu0 %v546
      %596 = vmatprep.subr.mxu0 0.0
      %597 = vmatpush1.msra.mxu0 %v545
      %598 = vmatprep.subr.mxu0 0.0
      %599 = vmatpush1.msra.mxu0 %v544
      %600 = vmatprep.subr.mxu0 0.0
      %601 = vmatpush2.msra.mxu0 0.0
      %602 = vmatprep.subr.mxu0 0.0
      %603 = vmatpush2.msra.mxu0 0.0
      %604 = vmatprep.subr.mxu0 0.0
      %605 = vmatpush2.msra.mxu0 0.0
      %606 = vmatprep.subr.mxu0 0.0
      %607 = vmatpush2.msra.mxu0 0.0
      %608 = vmatprep.subr.mxu0 0.0
      %609 = vmatpush2.msra.mxu0 0.0
      %610 = vmatprep.subr.mxu0 0.0
      %611 = vmatpush2.msra.mxu0 0.0
      %612 = vmatprep.subr.mxu0 0.0
      %613 = vmatpush2.msra.mxu0 0.0
      %614 = vmatprep.subr.mxu0 0.0
      %615 = vmatpush2.msra.mxu0 0.0
      %616 = vmatprep.subr.mxu0 0.0
      %617 = vmatpush2.msra.mxu0 0.0
      %618 = vmatprep.subr.mxu0 0.0
      %619 = vmatpush2.msra.mxu0 0.0
      %620 = vmatprep.subr.mxu0 0.0
      %621 = vmatpush2.msra.mxu0 0.0
      %622 = vmatprep.subr.mxu0 0.0
      %623 = vmatpush2.msra.mxu0 0.0
      %624 = vmatprep.subr.mxu0 0.0
      %625 = vmatpush2.msra.mxu0 0.0
      %626 = vmatprep.subr.mxu0 0.0
      %627 = vmatpush2.msra.mxu0 0.0
      %628 = vmatprep.subr.mxu0 0.0
      %629 = vmatpush2.msra.mxu0 0.0
      %630 = vmatprep.subr.mxu0 0.0
      %631 = vmatpush2.msra.mxu0 0.0
      %632 = vmatprep.mubr.f32.mxu0 0.0
      %633 = vmatmul.mubr.f32.gmra.mxu0 %v557
      %v634 = vpop.f32.mrf.mxu0
      %v635 = vadd.f32 %v553, %v634
      %v636 = vpop.f32.mrf.mxu0
      %637 = vmatprep.mubr.f32.mxu0 0.0
      %638 = vmatmul.mubr.f32.gmra.mxu0 %v560
      %v639 = vpop.f32.mrf.mxu0
      %v640 = vadd.f32 %v553, %v639
      %v641 = vpop.f32.mrf.mxu0
      %642 = vmatprep.mubr.f32.mxu0 0.0
      %643 = vmatmul.mubr.f32.gmra.mxu0 %v563
      %v644 = vpop.f32.mrf.mxu0
      %v645 = vadd.f32 %v553, %v644
      %v646 = vpop.f32.mrf.mxu0
      %647 = vmatprep.mubr.f32.mxu0 0.0
      %648 = vmatmul.mubr.f32.gmra.mxu0 %v566
      %v649 = vpop.f32.mrf.mxu0
      %v650 = vadd.f32 %v553, %v649
      %v651 = vpop.f32.mrf.mxu0
      %652 = vdwg.mxu0
      %v653 = vld [vmem:[%s468] sm:$0xff]
      %v655 = vsel %vm504, %v509, 0
      %657 = vmatprep.subr.mxu0 0.0
      %658 = vmatpush1.msra.mxu0 0.0
      %659 = vmatprep.subr.mxu0 0.0
      %660 = vmatpush1.msra.mxu0 0.0
      %661 = vmatprep.subr.mxu0 0.0
      %662 = vmatpush1.msra.mxu0 0.0
      %663 = vmatprep.subr.mxu0 0.0
      %664 = vmatpush1.msra.mxu0 0.0
      %665 = vmatprep.subr.mxu0 0.0
      %666 = vmatpush1.msra.mxu0 0.0
      %667 = vmatprep.subr.mxu0 0.0
      %668 = vmatpush1.msra.mxu0 0.0
      %669 = vmatprep.subr.mxu0 0.0
      %670 = vmatpush1.msra.mxu0 0.0
      %671 = vmatprep.subr.mxu0 0.0
      %672 = vmatpush1.msra.mxu0 0.0
      %673 = vmatprep.subr.mxu0 0.0
      %674 = vmatpush1.msra.mxu0 0.0
      %675 = vmatprep.subr.mxu0 0.0
      %676 = vmatpush1.msra.mxu0 0.0
      %677 = vmatprep.subr.mxu0 0.0
      %678 = vmatpush1.msra.mxu0 0.0
      %679 = vmatprep.subr.mxu0 0.0
      %680 = vmatpush1.msra.mxu0 0.0
      %681 = vmatprep.subr.mxu0 0.0
      %682 = vmatpush1.msra.mxu0 0.0
      %683 = vmatprep.subr.mxu0 0.0
      %684 = vmatpush1.msra.mxu0 0.0
      %685 = vmatprep.subr.mxu0 0.0
      %686 = vmatpush1.msra.mxu0 0.0
      %687 = vmatprep.subr.mxu0 0.0
      %688 = vmatpush1.msra.mxu0 %v635
      %689 = vmatprep.subr.mxu0 0.0
      %690 = vmatpush2.msra.mxu0 0.0
      %691 = vmatprep.subr.mxu0 0.0
      %692 = vmatpush2.msra.mxu0 0.0
      %693 = vmatprep.subr.mxu0 0.0
      %694 = vmatpush2.msra.mxu0 0.0
      %695 = vmatprep.subr.mxu0 0.0
      %696 = vmatpush2.msra.mxu0 0.0
      %697 = vmatprep.subr.mxu0 0.0
      %698 = vmatpush2.msra.mxu0 0.0
      %699 = vmatprep.subr.mxu0 0.0
      %700 = vmatpush2.msra.mxu0 0.0
      %701 = vmatprep.subr.mxu0 0.0
      %702 = vmatpush2.msra.mxu0 0.0
      %703 = vmatprep.subr.mxu0 0.0
      %704 = vmatpush2.msra.mxu0 0.0
      %705 = vmatprep.subr.mxu0 0.0
      %706 = vmatpush2.msra.mxu0 0.0
      %707 = vmatprep.subr.mxu0 0.0
      %708 = vmatpush2.msra.mxu0 0.0
      %709 = vmatprep.subr.mxu0 0.0
      %710 = vmatpush2.msra.mxu0 0.0
      %711 = vmatprep.subr.mxu0 0.0
      %712 = vmatpush2.msra.mxu0 0.0
      %713 = vmatprep.subr.mxu0 0.0
      %714 = vmatpush2.msra.mxu0 0.0
      %715 = vmatprep.subr.mxu0 0.0
      %716 = vmatpush2.msra.mxu0 0.0
      %717 = vmatprep.subr.mxu0 0.0
      %718 = vmatpush2.msra.mxu0 0.0
      %719 = vmatprep.subr.mxu0 0.0
      %720 = vmatpush2.msra.mxu0 0.0
      %721 = vmatprep.mubr.f32.mxu0 0.0
      %722 = vmatmul.mubr.f32.gmra.mxu0 %v655
      %v723 = vpop.f32.mrf.mxu0
      %v724 = vadd.f32 0.0, %v723
      %v725 = vpop.f32.mrf.mxu0
      %726 = vdwg.mxu0
      %v727 = vadd.f32 %v653, %v724
      %729 = vrot.lane.b32.xlu0 %v635, 126
      %v730 = vpop.permute.xlu0 %729
      %v733 = vsel %vm504, %v514, 0
      %735 = vmatprep.subr.mxu0 0.0
      %736 = vmatpush1.msra.mxu0 0.0
      %737 = vmatprep.subr.mxu0 0.0
      %738 = vmatpush1.msra.mxu0 0.0
      %739 = vmatprep.subr.mxu0 0.0
      %740 = vmatpush1.msra.mxu0 0.0
      %741 = vmatprep.subr.mxu0 0.0
      %742 = vmatpush1.msra.mxu0 0.0
      %743 = vmatprep.subr.mxu0 0.0
      %744 = vmatpush1.msra.mxu0 0.0
      %745 = vmatprep.subr.mxu0 0.0
      %746 = vmatpush1.msra.mxu0 0.0
      %747 = vmatprep.subr.mxu0 0.0
      %748 = vmatpush1.msra.mxu0 0.0
      %749 = vmatprep.subr.mxu0 0.0
      %750 = vmatpush1.msra.mxu0 0.0
      %751 = vmatprep.subr.mxu0 0.0
      %752 = vmatpush1.msra.mxu0 0.0
      %753 = vmatprep.subr.mxu0 0.0
      %754 = vmatpush1.msra.mxu0 0.0
      %755 = vmatprep.subr.mxu0 0.0
      %756 = vmatpush1.msra.mxu0 0.0
      %757 = vmatprep.subr.mxu0 0.0
      %758 = vmatpush1.msra.mxu0 0.0
      %759 = vmatprep.subr.mxu0 0.0
      %760 = vmatpush1.msra.mxu0 0.0
      %761 = vmatprep.subr.mxu0 0.0
      %762 = vmatpush1.msra.mxu0 0.0
      %763 = vmatprep.subr.mxu0 0.0
      %764 = vmatpush1.msra.mxu0 0.0
      %765 = vmatprep.subr.mxu0 0.0
      %766 = vmatpush1.msra.mxu0 %v730
      %767 = vmatprep.subr.mxu0 0.0
      %768 = vmatpush2.msra.mxu0 0.0
      %769 = vmatprep.subr.mxu0 0.0
      %770 = vmatpush2.msra.mxu0 0.0
      %771 = vmatprep.subr.mxu0 0.0
      %772 = vmatpush2.msra.mxu0 0.0
      %773 = vmatprep.subr.mxu0 0.0
      %774 = vmatpush2.msra.mxu0 0.0
      %775 = vmatprep.subr.mxu0 0.0
      %776 = vmatpush2.msra.mxu0 0.0
      %777 = vmatprep.subr.mxu0 0.0
      %778 = vmatpush2.msra.mxu0 0.0
      %779 = vmatprep.subr.mxu0 0.0
      %780 = vmatpush2.msra.mxu0 0.0
      %781 = vmatprep.subr.mxu0 0.0
      %782 = vmatpush2.msra.mxu0 0.0
      %783 = vmatprep.subr.mxu0 0.0
      %784 = vmatpush2.msra.mxu0 0.0
      %785 = vmatprep.subr.mxu0 0.0
      %786 = vmatpush2.msra.mxu0 0.0
      %787 = vmatprep.subr.mxu0 0.0
      %788 = vmatpush2.msra.mxu0 0.0
      %789 = vmatprep.subr.mxu0 0.0
      %790 = vmatpush2.msra.mxu0 0.0
      %791 = vmatprep.subr.mxu0 0.0
      %792 = vmatpush2.msra.mxu0 0.0
      %793 = vmatprep.subr.mxu0 0.0
      %794 = vmatpush2.msra.mxu0 0.0
      %795 = vmatprep.subr.mxu0 0.0
      %796 = vmatpush2.msra.mxu0 0.0
      %797 = vmatprep.subr.mxu0 0.0
      %798 = vmatpush2.msra.mxu0 0.0
      %799 = vmatprep.mubr.f32.mxu0 0.0
      %800 = vmatmul.mubr.f32.gmra.mxu0 %v733
      %v801 = vpop.f32.mrf.mxu0
      %v802 = vadd.f32 0.0, %v801
      %v803 = vpop.f32.mrf.mxu0
      %804 = vdwg.mxu0
      %v805 = vadd.f32 %v653, %v802
      %v806 = vld [vmem:[%s473] sm:$0xff]
      %v808 = vsel %vm504, %v806, 0
      %810 = vmatprep.subr.mxu0 0.0
      %811 = vmatpush1.msra.mxu0 0.0
      %812 = vmatprep.subr.mxu0 0.0
      %813 = vmatpush1.msra.mxu0 0.0
      %814 = vmatprep.subr.mxu0 0.0
      %815 = vmatpush1.msra.mxu0 0.0
      %816 = vmatprep.subr.mxu0 0.0
      %817 = vmatpush1.msra.mxu0 0.0
      %818 = vmatprep.subr.mxu0 0.0
      %819 = vmatpush1.msra.mxu0 0.0
      %820 = vmatprep.subr.mxu0 0.0
      %821 = vmatpush1.msra.mxu0 0.0
      %822 = vmatprep.subr.mxu0 0.0
      %823 = vmatpush1.msra.mxu0 0.0
      %824 = vmatprep.subr.mxu0 0.0
      %825 = vmatpush1.msra.mxu0 0.0
      %826 = vmatprep.subr.mxu0 0.0
      %827 = vmatpush1.msra.mxu0 0.0
      %828 = vmatprep.subr.mxu0 0.0
      %829 = vmatpush1.msra.mxu0 0.0
      %830 = vmatprep.subr.mxu0 0.0
      %831 = vmatpush1.msra.mxu0 0.0
      %832 = vmatprep.subr.mxu0 0.0
      %833 = vmatpush1.msra.mxu0 0.0
      %834 = vmatprep.subr.mxu0 0.0
      %835 = vmatpush1.msra.mxu0 0.0
      %836 = vmatprep.subr.mxu0 0.0
      %837 = vmatpush1.msra.mxu0 0.0
      %838 = vmatprep.subr.mxu0 0.0
      %839 = vmatpush1.msra.mxu0 0.0
      %840 = vmatprep.subr.mxu0 0.0
      %841 = vmatpush1.msra.mxu0 %v727
      %842 = vmatprep.subr.mxu0 0.0
      %843 = vmatpush2.msra.mxu0 0.0
      %844 = vmatprep.subr.mxu0 0.0
      %845 = vmatpush2.msra.mxu0 0.0
      %846 = vmatprep.subr.mxu0 0.0
      %847 = vmatpush2.msra.mxu0 0.0
      %848 = vmatprep.subr.mxu0 0.0
      %849 = vmatpush2.msra.mxu0 0.0
      %850 = vmatprep.subr.mxu0 0.0
      %851 = vmatpush2.msra.mxu0 0.0
      %852 = vmatprep.subr.mxu0 0.0
      %853 = vmatpush2.msra.mxu0 0.0
      %854 = vmatprep.subr.mxu0 0.0
      %855 = vmatpush2.msra.mxu0 0.0
      %856 = vmatprep.subr.mxu0 0.0
      %857 = vmatpush2.msra.mxu0 0.0
      %858 = vmatprep.subr.mxu0 0.0
      %859 = vmatpush2.msra.mxu0 0.0
      %860 = vmatprep.subr.mxu0 0.0
      %861 = vmatpush2.msra.mxu0 0.0
      %862 = vmatprep.subr.mxu0 0.0
      %863 = vmatpush2.msra.mxu0 0.0
      %864 = vmatprep.subr.mxu0 0.0
      %865 = vmatpush2.msra.mxu0 0.0
      %866 = vmatprep.subr.mxu0 0.0
      %867 = vmatpush2.msra.mxu0 0.0
      %868 = vmatprep.subr.mxu0 0.0
      %869 = vmatpush2.msra.mxu0 0.0
      %870 = vmatprep.subr.mxu0 0.0
      %871 = vmatpush2.msra.mxu0 0.0
      %872 = vmatprep.subr.mxu0 0.0
      %873 = vmatpush2.msra.mxu0 0.0
      %874 = vmatprep.mubr.f32.mxu0 0.0
      %875 = vmatmul.mubr.f32.gmra.mxu0 %v808
      %v876 = vpop.f32.mrf.mxu0
      %v877 = vadd.f32 0.0, %v876
      %v878 = vpop.f32.mrf.mxu0
      %879 = vdwg.mxu0
      %v880 = vld [vmem:[%s478] sm:$0xff]
      %v882 = vsel %vm504, %v880, 0
      %884 = vmatprep.subr.mxu0 0.0
      %885 = vmatpush1.msra.mxu0 0.0
      %886 = vmatprep.subr.mxu0 0.0
      %887 = vmatpush1.msra.mxu0 0.0
      %888 = vmatprep.subr.mxu0 0.0
      %889 = vmatpush1.msra.mxu0 0.0
      %890 = vmatprep.subr.mxu0 0.0
      %891 = vmatpush1.msra.mxu0 0.0
      %892 = vmatprep.subr.mxu0 0.0
      %893 = vmatpush1.msra.mxu0 0.0
      %894 = vmatprep.subr.mxu0 0.0
      %895 = vmatpush1.msra.mxu0 0.0
      %896 = vmatprep.subr.mxu0 0.0
      %897 = vmatpush1.msra.mxu0 0.0
      %898 = vmatprep.subr.mxu0 0.0
      %899 = vmatpush1.msra.mxu0 0.0
      %900 = vmatprep.subr.mxu0 0.0
      %901 = vmatpush1.msra.mxu0 0.0
      %902 = vmatprep.subr.mxu0 0.0
      %903 = vmatpush1.msra.mxu0 0.0
      %904 = vmatprep.subr.mxu0 0.0
      %905 = vmatpush1.msra.mxu0 0.0
      %906 = vmatprep.subr.mxu0 0.0
      %907 = vmatpush1.msra.mxu0 0.0
      %908 = vmatprep.subr.mxu0 0.0
      %909 = vmatpush1.msra.mxu0 0.0
      %910 = vmatprep.subr.mxu0 0.0
      %911 = vmatpush1.msra.mxu0 0.0
      %912 = vmatprep.subr.mxu0 0.0
      %913 = vmatpush1.msra.mxu0 0.0
      %914 = vmatprep.subr.mxu0 0.0
      %915 = vmatpush1.msra.mxu0 %v805
      %916 = vmatprep.subr.mxu0 0.0
      %917 = vmatpush2.msra.mxu0 0.0
      %918 = vmatprep.subr.mxu0 0.0
      %919 = vmatpush2.msra.mxu0 0.0
      %920 = vmatprep.subr.mxu0 0.0
      %921 = vmatpush2.msra.mxu0 0.0
      %922 = vmatprep.subr.mxu0 0.0
      %923 = vmatpush2.msra.mxu0 0.0
      %924 = vmatprep.subr.mxu0 0.0
      %925 = vmatpush2.msra.mxu0 0.0
      %926 = vmatprep.subr.mxu0 0.0
      %927 = vmatpush2.msra.mxu0 0.0
      %928 = vmatprep.subr.mxu0 0.0
      %929 = vmatpush2.msra.mxu0 0.0
      %930 = vmatprep.subr.mxu0 0.0
      %931 = vmatpush2.msra.mxu0 0.0
      %932 = vmatprep.subr.mxu0 0.0
      %933 = vmatpush2.msra.mxu0 0.0
      %934 = vmatprep.subr.mxu0 0.0
      %935 = vmatpush2.msra.mxu0 0.0
      %936 = vmatprep.subr.mxu0 0.0
      %937 = vmatpush2.msra.mxu0 0.0
      %938 = vmatprep.subr.mxu0 0.0
      %939 = vmatpush2.msra.mxu0 0.0
      %940 = vmatprep.subr.mxu0 0.0
      %941 = vmatpush2.msra.mxu0 0.0
      %942 = vmatprep.subr.mxu0 0.0
      %943 = vmatpush2.msra.mxu0 0.0
      %944 = vmatprep.subr.mxu0 0.0
      %945 = vmatpush2.msra.mxu0 0.0
      %946 = vmatprep.subr.mxu0 0.0
      %947 = vmatpush2.msra.mxu0 0.0
      %948 = vmatprep.mubr.f32.mxu0 0.0
      %949 = vmatmul.mubr.f32.gmra.mxu0 %v882
      %v950 = vpop.f32.mrf.mxu0
      %v951 = vadd.f32 0.0, %v950
      %v952 = vpop.f32.mrf.mxu0
      %953 = vdwg.mxu0
      %955 = vrot.lane.b32.xlu0 %v951, 2
      %v956 = vpop.permute.xlu0 %955
      %vm958 = vcmask 15360
      %v959 = vsel %vm958, %v877, %v956
      %s960 = scalar_lea.vmem %s468, 8
      %v961 = vld [vmem:[%s960] sm:$0xff]
      %962 = vmatprep.subr.mxu0 0.0
      %963 = vmatpush1.msra.mxu0 0.0
      %964 = vmatprep.subr.mxu0 0.0
      %965 = vmatpush1.msra.mxu0 0.0
      %966 = vmatprep.subr.mxu0 0.0
      %967 = vmatpush1.msra.mxu0 0.0
      %968 = vmatprep.subr.mxu0 0.0
      %969 = vmatpush1.msra.mxu0 0.0
      %970 = vmatprep.subr.mxu0 0.0
      %971 = vmatpush1.msra.mxu0 0.0
      %972 = vmatprep.subr.mxu0 0.0
      %973 = vmatpush1.msra.mxu0 0.0
      %974 = vmatprep.subr.mxu0 0.0
      %975 = vmatpush1.msra.mxu0 0.0
      %976 = vmatprep.subr.mxu0 0.0
      %977 = vmatpush1.msra.mxu0 0.0
      %978 = vmatprep.subr.mxu0 0.0
      %979 = vmatpush1.msra.mxu0 0.0
      %980 = vmatprep.subr.mxu0 0.0
      %981 = vmatpush1.msra.mxu0 0.0
      %982 = vmatprep.subr.mxu0 0.0
      %983 = vmatpush1.msra.mxu0 0.0
      %984 = vmatprep.subr.mxu0 0.0
      %985 = vmatpush1.msra.mxu0 0.0
      %986 = vmatprep.subr.mxu0 0.0
      %987 = vmatpush1.msra.mxu0 0.0
      %988 = vmatprep.subr.mxu0 0.0
      %989 = vmatpush1.msra.mxu0 0.0
      %990 = vmatprep.subr.mxu0 0.0
      %991 = vmatpush1.msra.mxu0 0.0
      %992 = vmatprep.subr.mxu0 0.0
      %993 = vmatpush1.msra.mxu0 %v640
      %994 = vmatprep.subr.mxu0 0.0
      %995 = vmatpush2.msra.mxu0 0.0
      %996 = vmatprep.subr.mxu0 0.0
      %997 = vmatpush2.msra.mxu0 0.0
      %998 = vmatprep.subr.mxu0 0.0
      %999 = vmatpush2.msra.mxu0 0.0
      %1000 = vmatprep.subr.mxu0 0.0
      %1001 = vmatpush2.msra.mxu0 0.0
      %1002 = vmatprep.subr.mxu0 0.0
      %1003 = vmatpush2.msra.mxu0 0.0
      %1004 = vmatprep.subr.mxu0 0.0
      %1005 = vmatpush2.msra.mxu0 0.0
      %1006 = vmatprep.subr.mxu0 0.0
      %1007 = vmatpush2.msra.mxu0 0.0
      %1008 = vmatprep.subr.mxu0 0.0
      %1009 = vmatpush2.msra.mxu0 0.0
      %1010 = vmatprep.subr.mxu0 0.0
      %1011 = vmatpush2.msra.mxu0 0.0
      %1012 = vmatprep.subr.mxu0 0.0
      %1013 = vmatpush2.msra.mxu0 0.0
      %1014 = vmatprep.subr.mxu0 0.0
      %1015 = vmatpush2.msra.mxu0 0.0
      %1016 = vmatprep.subr.mxu0 0.0
      %1017 = vmatpush2.msra.mxu0 0.0
      %1018 = vmatprep.subr.mxu0 0.0
      %1019 = vmatpush2.msra.mxu0 0.0
      %1020 = vmatprep.subr.mxu0 0.0
      %1021 = vmatpush2.msra.mxu0 0.0
      %1022 = vmatprep.subr.mxu0 0.0
      %1023 = vmatpush2.msra.mxu0 0.0
      %1024 = vmatprep.subr.mxu0 0.0
      %1025 = vmatpush2.msra.mxu0 0.0
      %1026 = vmatprep.mubr.f32.mxu0 0.0
      %1027 = vmatmul.mubr.f32.gmra.mxu0 %v655
      %v1028 = vpop.f32.mrf.mxu0
      %v1029 = vadd.f32 0.0, %v1028
      %v1030 = vpop.f32.mrf.mxu0
      %1031 = vdwg.mxu0
      %v1032 = vadd.f32 %v961, %v1029
      %1034 = vrot.lane.b32.xlu0 %v640, 126
      %v1035 = vpop.permute.xlu0 %1034
      %1037 = vmatprep.subr.mxu0 0.0
      %1038 = vmatpush1.msra.mxu0 0.0
      %1039 = vmatprep.subr.mxu0 0.0
      %1040 = vmatpush1.msra.mxu0 0.0
      %1041 = vmatprep.subr.mxu0 0.0
      %1042 = vmatpush1.msra.mxu0 0.0
      %1043 = vmatprep.subr.mxu0 0.0
      %1044 = vmatpush1.msra.mxu0 0.0
      %1045 = vmatprep.subr.mxu0 0.0
      %1046 = vmatpush1.msra.mxu0 0.0
      %1047 = vmatprep.subr.mxu0 0.0
      %1048 = vmatpush1.msra.mxu0 0.0
      %1049 = vmatprep.subr.mxu0 0.0
      %1050 = vmatpush1.msra.mxu0 0.0
      %1051 = vmatprep.subr.mxu0 0.0
      %1052 = vmatpush1.msra.mxu0 0.0
      %1053 = vmatprep.subr.mxu0 0.0
      %1054 = vmatpush1.msra.mxu0 0.0
      %1055 = vmatprep.subr.mxu0 0.0
      %1056 = vmatpush1.msra.mxu0 0.0
      %1057 = vmatprep.subr.mxu0 0.0
      %1058 = vmatpush1.msra.mxu0 0.0
      %1059 = vmatprep.subr.mxu0 0.0
      %1060 = vmatpush1.msra.mxu0 0.0
      %1061 = vmatprep.subr.mxu0 0.0
      %1062 = vmatpush1.msra.mxu0 0.0
      %1063 = vmatprep.subr.mxu0 0.0
      %1064 = vmatpush1.msra.mxu0 0.0
      %1065 = vmatprep.subr.mxu0 0.0
      %1066 = vmatpush1.msra.mxu0 0.0
      %1067 = vmatprep.subr.mxu0 0.0
      %1068 = vmatpush1.msra.mxu0 %v1035
      %1069 = vmatprep.subr.mxu0 0.0
      %1070 = vmatpush2.msra.mxu0 0.0
      %1071 = vmatprep.subr.mxu0 0.0
      %1072 = vmatpush2.msra.mxu0 0.0
      %1073 = vmatprep.subr.mxu0 0.0
      %1074 = vmatpush2.msra.mxu0 0.0
      %1075 = vmatprep.subr.mxu0 0.0
      %1076 = vmatpush2.msra.mxu0 0.0
      %1077 = vmatprep.subr.mxu0 0.0
      %1078 = vmatpush2.msra.mxu0 0.0
      %1079 = vmatprep.subr.mxu0 0.0
      %1080 = vmatpush2.msra.mxu0 0.0
      %1081 = vmatprep.subr.mxu0 0.0
      %1082 = vmatpush2.msra.mxu0 0.0
      %1083 = vmatprep.subr.mxu0 0.0
      %1084 = vmatpush2.msra.mxu0 0.0
      %1085 = vmatprep.subr.mxu0 0.0
      %1086 = vmatpush2.msra.mxu0 0.0
      %1087 = vmatprep.subr.mxu0 0.0
      %1088 = vmatpush2.msra.mxu0 0.0
      %1089 = vmatprep.subr.mxu0 0.0
      %1090 = vmatpush2.msra.mxu0 0.0
      %1091 = vmatprep.subr.mxu0 0.0
      %1092 = vmatpush2.msra.mxu0 0.0
      %1093 = vmatprep.subr.mxu0 0.0
      %1094 = vmatpush2.msra.mxu0 0.0
      %1095 = vmatprep.subr.mxu0 0.0
      %1096 = vmatpush2.msra.mxu0 0.0
      %1097 = vmatprep.subr.mxu0 0.0
      %1098 = vmatpush2.msra.mxu0 0.0
      %1099 = vmatprep.subr.mxu0 0.0
      %1100 = vmatpush2.msra.mxu0 0.0
      %1101 = vmatprep.mubr.f32.mxu0 0.0
      %1102 = vmatmul.mubr.f32.gmra.mxu0 %v733
      %v1103 = vpop.f32.mrf.mxu0
      %v1104 = vadd.f32 0.0, %v1103
      %v1105 = vpop.f32.mrf.mxu0
      %1106 = vdwg.mxu0
      %v1107 = vadd.f32 %v961, %v1104
      %s1108 = scalar_lea.vmem %s473, 8
      %v1109 = vld [vmem:[%s1108] sm:$0xff]
      %v1111 = vsel %vm504, %v1109, 0
      %1113 = vmatprep.subr.mxu0 0.0
      %1114 = vmatpush1.msra.mxu0 0.0
      %1115 = vmatprep.subr.mxu0 0.0
      %1116 = vmatpush1.msra.mxu0 0.0
      %1117 = vmatprep.subr.mxu0 0.0
      %1118 = vmatpush1.msra.mxu0 0.0
      %1119 = vmatprep.subr.mxu0 0.0
      %1120 = vmatpush1.msra.mxu0 0.0
      %1121 = vmatprep.subr.mxu0 0.0
      %1122 = vmatpush1.msra.mxu0 0.0
      %1123 = vmatprep.subr.mxu0 0.0
      %1124 = vmatpush1.msra.mxu0 0.0
      %1125 = vmatprep.subr.mxu0 0.0
      %1126 = vmatpush1.msra.mxu0 0.0
      %1127 = vmatprep.subr.mxu0 0.0
      %1128 = vmatpush1.msra.mxu0 0.0
      %1129 = vmatprep.subr.mxu0 0.0
      %1130 = vmatpush1.msra.mxu0 0.0
      %1131 = vmatprep.subr.mxu0 0.0
      %1132 = vmatpush1.msra.mxu0 0.0
      %1133 = vmatprep.subr.mxu0 0.0
      %1134 = vmatpush1.msra.mxu0 0.0
      %1135 = vmatprep.subr.mxu0 0.0
      %1136 = vmatpush1.msra.mxu0 0.0
      %1137 = vmatprep.subr.mxu0 0.0
      %1138 = vmatpush1.msra.mxu0 0.0
      %1139 = vmatprep.subr.mxu0 0.0
      %1140 = vmatpush1.msra.mxu0 0.0
      %1141 = vmatprep.subr.mxu0 0.0
      %1142 = vmatpush1.msra.mxu0 0.0
      %1143 = vmatprep.subr.mxu0 0.0
      %1144 = vmatpush1.msra.mxu0 %v1032
      %1145 = vmatprep.subr.mxu0 0.0
      %1146 = vmatpush2.msra.mxu0 0.0
      %1147 = vmatprep.subr.mxu0 0.0
      %1148 = vmatpush2.msra.mxu0 0.0
      %1149 = vmatprep.subr.mxu0 0.0
      %1150 = vmatpush2.msra.mxu0 0.0
      %1151 = vmatprep.subr.mxu0 0.0
      %1152 = vmatpush2.msra.mxu0 0.0
      %1153 = vmatprep.subr.mxu0 0.0
      %1154 = vmatpush2.msra.mxu0 0.0
      %1155 = vmatprep.subr.mxu0 0.0
      %1156 = vmatpush2.msra.mxu0 0.0
      %1157 = vmatprep.subr.mxu0 0.0
      %1158 = vmatpush2.msra.mxu0 0.0
      %1159 = vmatprep.subr.mxu0 0.0
      %1160 = vmatpush2.msra.mxu0 0.0
      %1161 = vmatprep.subr.mxu0 0.0
      %1162 = vmatpush2.msra.mxu0 0.0
      %1163 = vmatprep.subr.mxu0 0.0
      %1164 = vmatpush2.msra.mxu0 0.0
      %1165 = vmatprep.subr.mxu0 0.0
      %1166 = vmatpush2.msra.mxu0 0.0
      %1167 = vmatprep.subr.mxu0 0.0
      %1168 = vmatpush2.msra.mxu0 0.0
      %1169 = vmatprep.subr.mxu0 0.0
      %1170 = vmatpush2.msra.mxu0 0.0
      %1171 = vmatprep.subr.mxu0 0.0
      %1172 = vmatpush2.msra.mxu0 0.0
      %1173 = vmatprep.subr.mxu0 0.0
      %1174 = vmatpush2.msra.mxu0 0.0
      %1175 = vmatprep.subr.mxu0 0.0
      %1176 = vmatpush2.msra.mxu0 0.0
      %1177 = vmatprep.mubr.f32.mxu0 0.0
      %1178 = vmatmul.mubr.f32.gmra.mxu0 %v1111
      %v1179 = vpop.f32.mrf.mxu0
      %v1180 = vadd.f32 0.0, %v1179
      %v1181 = vpop.f32.mrf.mxu0
      %1182 = vdwg.mxu0
      %s1183 = scalar_lea.vmem %s478, 8
      %v1184 = vld [vmem:[%s1183] sm:$0xff]
      %v1186 = vsel %vm504, %v1184, 0
      %1188 = vmatprep.subr.mxu0 0.0
      %1189 = vmatpush1.msra.mxu0 0.0
      %1190 = vmatprep.subr.mxu0 0.0
      %1191 = vmatpush1.msra.mxu0 0.0
      %1192 = vmatprep.subr.mxu0 0.0
      %1193 = vmatpush1.msra.mxu0 0.0
      %1194 = vmatprep.subr.mxu0 0.0
      %1195 = vmatpush1.msra.mxu0 0.0
      %1196 = vmatprep.subr.mxu0 0.0
      %1197 = vmatpush1.msra.mxu0 0.0
      %1198 = vmatprep.subr.mxu0 0.0
      %1199 = vmatpush1.msra.mxu0 0.0
      %1200 = vmatprep.subr.mxu0 0.0
      %1201 = vmatpush1.msra.mxu0 0.0
      %1202 = vmatprep.subr.mxu0 0.0
      %1203 = vmatpush1.msra.mxu0 0.0
      %1204 = vmatprep.subr.mxu0 0.0
      %1205 = vmatpush1.msra.mxu0 0.0
      %1206 = vmatprep.subr.mxu0 0.0
      %1207 = vmatpush1.msra.mxu0 0.0
      %1208 = vmatprep.subr.mxu0 0.0
      %1209 = vmatpush1.msra.mxu0 0.0
      %1210 = vmatprep.subr.mxu0 0.0
      %1211 = vmatpush1.msra.mxu0 0.0
      %1212 = vmatprep.subr.mxu0 0.0
      %1213 = vmatpush1.msra.mxu0 0.0
      %1214 = vmatprep.subr.mxu0 0.0
      %1215 = vmatpush1.msra.mxu0 0.0
      %1216 = vmatprep.subr.mxu0 0.0
      %1217 = vmatpush1.msra.mxu0 0.0
      %1218 = vmatprep.subr.mxu0 0.0
      %1219 = vmatpush1.msra.mxu0 %v1107
      %1220 = vmatprep.subr.mxu0 0.0
      %1221 = vmatpush2.msra.mxu0 0.0
      %1222 = vmatprep.subr.mxu0 0.0
      %1223 = vmatpush2.msra.mxu0 0.0
      %1224 = vmatprep.subr.mxu0 0.0
      %1225 = vmatpush2.msra.mxu0 0.0
      %1226 = vmatprep.subr.mxu0 0.0
      %1227 = vmatpush2.msra.mxu0 0.0
      %1228 = vmatprep.subr.mxu0 0.0
      %1229 = vmatpush2.msra.mxu0 0.0
      %1230 = vmatprep.subr.mxu0 0.0
      %1231 = vmatpush2.msra.mxu0 0.0
      %1232 = vmatprep.subr.mxu0 0.0
      %1233 = vmatpush2.msra.mxu0 0.0
      %1234 = vmatprep.subr.mxu0 0.0
      %1235 = vmatpush2.msra.mxu0 0.0
      %1236 = vmatprep.subr.mxu0 0.0
      %1237 = vmatpush2.msra.mxu0 0.0
      %1238 = vmatprep.subr.mxu0 0.0
      %1239 = vmatpush2.msra.mxu0 0.0
      %1240 = vmatprep.subr.mxu0 0.0
      %1241 = vmatpush2.msra.mxu0 0.0
      %1242 = vmatprep.subr.mxu0 0.0
      %1243 = vmatpush2.msra.mxu0 0.0
      %1244 = vmatprep.subr.mxu0 0.0
      %1245 = vmatpush2.msra.mxu0 0.0
      %1246 = vmatprep.subr.mxu0 0.0
      %1247 = vmatpush2.msra.mxu0 0.0
      %1248 = vmatprep.subr.mxu0 0.0
      %1249 = vmatpush2.msra.mxu0 0.0
      %1250 = vmatprep.subr.mxu0 0.0
      %1251 = vmatpush2.msra.mxu0 0.0
      %1252 = vmatprep.mubr.f32.mxu0 0.0
      %1253 = vmatmul.mubr.f32.gmra.mxu0 %v1186
      %v1254 = vpop.f32.mrf.mxu0
      %v1255 = vadd.f32 0.0, %v1254
      %v1256 = vpop.f32.mrf.mxu0
      %1257 = vdwg.mxu0
      %1259 = vrot.lane.b32.xlu0 %v1255, 2
      %v1260 = vpop.permute.xlu0 %1259
      %v1262 = vsel %vm958, %v1180, %v1260
      %s1263 = scalar_lea.vmem %s468, 16
      %v1264 = vld [vmem:[%s1263] sm:$0xff]
      %1265 = vmatprep.subr.mxu0 0.0
      %1266 = vmatpush1.msra.mxu0 0.0
      %1267 = vmatprep.subr.mxu0 0.0
      %1268 = vmatpush1.msra.mxu0 0.0
      %1269 = vmatprep.subr.mxu0 0.0
      %1270 = vmatpush1.msra.mxu0 0.0
      %1271 = vmatprep.subr.mxu0 0.0
      %1272 = vmatpush1.msra.mxu0 0.0
      %1273 = vmatprep.subr.mxu0 0.0
      %1274 = vmatpush1.msra.mxu0 0.0
      %1275 = vmatprep.subr.mxu0 0.0
      %1276 = vmatpush1.msra.mxu0 0.0
      %1277 = vmatprep.subr.mxu0 0.0
      %1278 = vmatpush1.msra.mxu0 0.0
      %1279 = vmatprep.subr.mxu0 0.0
      %1280 = vmatpush1.msra.mxu0 0.0
      %1281 = vmatprep.subr.mxu0 0.0
      %1282 = vmatpush1.msra.mxu0 0.0
      %1283 = vmatprep.subr.mxu0 0.0
      %1284 = vmatpush1.msra.mxu0 0.0
      %1285 = vmatprep.subr.mxu0 0.0
      %1286 = vmatpush1.msra.mxu0 0.0
      %1287 = vmatprep.subr.mxu0 0.0
      %1288 = vmatpush1.msra.mxu0 0.0
      %1289 = vmatprep.subr.mxu0 0.0
      %1290 = vmatpush1.msra.mxu0 0.0
      %1291 = vmatprep.subr.mxu0 0.0
      %1292 = vmatpush1.msra.mxu0 0.0
      %1293 = vmatprep.subr.mxu0 0.0
      %1294 = vmatpush1.msra.mxu0 0.0
      %1295 = vmatprep.subr.mxu0 0.0
      %1296 = vmatpush1.msra.mxu0 %v645
      %1297 = vmatprep.subr.mxu0 0.0
      %1298 = vmatpush2.msra.mxu0 0.0
      %1299 = vmatprep.subr.mxu0 0.0
      %1300 = vmatpush2.msra.mxu0 0.0
      %1301 = vmatprep.subr.mxu0 0.0
      %1302 = vmatpush2.msra.mxu0 0.0
      %1303 = vmatprep.subr.mxu0 0.0
      %1304 = vmatpush2.msra.mxu0 0.0
      %1305 = vmatprep.subr.mxu0 0.0
      %1306 = vmatpush2.msra.mxu0 0.0
      %1307 = vmatprep.subr.mxu0 0.0
      %1308 = vmatpush2.msra.mxu0 0.0
      %1309 = vmatprep.subr.mxu0 0.0
      %1310 = vmatpush2.msra.mxu0 0.0
      %1311 = vmatprep.subr.mxu0 0.0
      %1312 = vmatpush2.msra.mxu0 0.0
      %1313 = vmatprep.subr.mxu0 0.0
      %1314 = vmatpush2.msra.mxu0 0.0
      %1315 = vmatprep.subr.mxu0 0.0
      %1316 = vmatpush2.msra.mxu0 0.0
      %1317 = vmatprep.subr.mxu0 0.0
      %1318 = vmatpush2.msra.mxu0 0.0
      %1319 = vmatprep.subr.mxu0 0.0
      %1320 = vmatpush2.msra.mxu0 0.0
      %1321 = vmatprep.subr.mxu0 0.0
      %1322 = vmatpush2.msra.mxu0 0.0
      %1323 = vmatprep.subr.mxu0 0.0
      %1324 = vmatpush2.msra.mxu0 0.0
      %1325 = vmatprep.subr.mxu0 0.0
      %1326 = vmatpush2.msra.mxu0 0.0
      %1327 = vmatprep.subr.mxu0 0.0
      %1328 = vmatpush2.msra.mxu0 0.0
      %1329 = vmatprep.mubr.f32.mxu0 0.0
      %1330 = vmatmul.mubr.f32.gmra.mxu0 %v655
      %v1331 = vpop.f32.mrf.mxu0
      %v1332 = vadd.f32 0.0, %v1331
      %v1333 = vpop.f32.mrf.mxu0
      %1334 = vdwg.mxu0
      %v1335 = vadd.f32 %v1264, %v1332
      %1337 = vrot.lane.b32.xlu0 %v645, 126
      %v1338 = vpop.permute.xlu0 %1337
      %1340 = vmatprep.subr.mxu0 0.0
      %1341 = vmatpush1.msra.mxu0 0.0
      %1342 = vmatprep.subr.mxu0 0.0
      %1343 = vmatpush1.msra.mxu0 0.0
      %1344 = vmatprep.subr.mxu0 0.0
      %1345 = vmatpush1.msra.mxu0 0.0
      %1346 = vmatprep.subr.mxu0 0.0
      %1347 = vmatpush1.msra.mxu0 0.0
      %1348 = vmatprep.subr.mxu0 0.0
      %1349 = vmatpush1.msra.mxu0 0.0
      %1350 = vmatprep.subr.mxu0 0.0
      %1351 = vmatpush1.msra.mxu0 0.0
      %1352 = vmatprep.subr.mxu0 0.0
      %1353 = vmatpush1.msra.mxu0 0.0
      %1354 = vmatprep.subr.mxu0 0.0
      %1355 = vmatpush1.msra.mxu0 0.0
      %1356 = vmatprep.subr.mxu0 0.0
      %1357 = vmatpush1.msra.mxu0 0.0
      %1358 = vmatprep.subr.mxu0 0.0
      %1359 = vmatpush1.msra.mxu0 0.0
      %1360 = vmatprep.subr.mxu0 0.0
      %1361 = vmatpush1.msra.mxu0 0.0
      %1362 = vmatprep.subr.mxu0 0.0
      %1363 = vmatpush1.msra.mxu0 0.0
      %1364 = vmatprep.subr.mxu0 0.0
      %1365 = vmatpush1.msra.mxu0 0.0
      %1366 = vmatprep.subr.mxu0 0.0
      %1367 = vmatpush1.msra.mxu0 0.0
      %1368 = vmatprep.subr.mxu0 0.0
      %1369 = vmatpush1.msra.mxu0 0.0
      %1370 = vmatprep.subr.mxu0 0.0
      %1371 = vmatpush1.msra.mxu0 %v1338
      %1372 = vmatprep.subr.mxu0 0.0
      %1373 = vmatpush2.msra.mxu0 0.0
      %1374 = vmatprep.subr.mxu0 0.0
      %1375 = vmatpush2.msra.mxu0 0.0
      %1376 = vmatprep.subr.mxu0 0.0
      %1377 = vmatpush2.msra.mxu0 0.0
      %1378 = vmatprep.subr.mxu0 0.0
      %1379 = vmatpush2.msra.mxu0 0.0
      %1380 = vmatprep.subr.mxu0 0.0
      %1381 = vmatpush2.msra.mxu0 0.0
      %1382 = vmatprep.subr.mxu0 0.0
      %1383 = vmatpush2.msra.mxu0 0.0
      %1384 = vmatprep.subr.mxu0 0.0
      %1385 = vmatpush2.msra.mxu0 0.0
      %1386 = vmatprep.subr.mxu0 0.0
      %1387 = vmatpush2.msra.mxu0 0.0
      %1388 = vmatprep.subr.mxu0 0.0
      %1389 = vmatpush2.msra.mxu0 0.0
      %1390 = vmatprep.subr.mxu0 0.0
      %1391 = vmatpush2.msra.mxu0 0.0
      %1392 = vmatprep.subr.mxu0 0.0
      %1393 = vmatpush2.msra.mxu0 0.0
      %1394 = vmatprep.subr.mxu0 0.0
      %1395 = vmatpush2.msra.mxu0 0.0
      %1396 = vmatprep.subr.mxu0 0.0
      %1397 = vmatpush2.msra.mxu0 0.0
      %1398 = vmatprep.subr.mxu0 0.0
      %1399 = vmatpush2.msra.mxu0 0.0
      %1400 = vmatprep.subr.mxu0 0.0
      %1401 = vmatpush2.msra.mxu0 0.0
      %1402 = vmatprep.subr.mxu0 0.0
      %1403 = vmatpush2.msra.mxu0 0.0
      %1404 = vmatprep.mubr.f32.mxu0 0.0
      %1405 = vmatmul.mubr.f32.gmra.mxu0 %v733
      %v1406 = vpop.f32.mrf.mxu0
      %v1407 = vadd.f32 0.0, %v1406
      %v1408 = vpop.f32.mrf.mxu0
      %1409 = vdwg.mxu0
      %v1410 = vadd.f32 %v1264, %v1407
      %s1411 = scalar_lea.vmem %s473, 16
      %v1412 = vld [vmem:[%s1411] sm:$0xff]
      %v1414 = vsel %vm504, %v1412, 0
      %1416 = vmatprep.subr.mxu0 0.0
      %1417 = vmatpush1.msra.mxu0 0.0
      %1418 = vmatprep.subr.mxu0 0.0
      %1419 = vmatpush1.msra.mxu0 0.0
      %1420 = vmatprep.subr.mxu0 0.0
      %1421 = vmatpush1.msra.mxu0 0.0
      %1422 = vmatprep.subr.mxu0 0.0
      %1423 = vmatpush1.msra.mxu0 0.0
      %1424 = vmatprep.subr.mxu0 0.0
      %1425 = vmatpush1.msra.mxu0 0.0
      %1426 = vmatprep.subr.mxu0 0.0
      %1427 = vmatpush1.msra.mxu0 0.0
      %1428 = vmatprep.subr.mxu0 0.0
      %1429 = vmatpush1.msra.mxu0 0.0
      %1430 = vmatprep.subr.mxu0 0.0
      %1431 = vmatpush1.msra.mxu0 0.0
      %1432 = vmatprep.subr.mxu0 0.0
      %1433 = vmatpush1.msra.mxu0 0.0
      %1434 = vmatprep.subr.mxu0 0.0
      %1435 = vmatpush1.msra.mxu0 0.0
      %1436 = vmatprep.subr.mxu0 0.0
      %1437 = vmatpush1.msra.mxu0 0.0
      %1438 = vmatprep.subr.mxu0 0.0
      %1439 = vmatpush1.msra.mxu0 0.0
      %1440 = vmatprep.subr.mxu0 0.0
      %1441 = vmatpush1.msra.mxu0 0.0
      %1442 = vmatprep.subr.mxu0 0.0
      %1443 = vmatpush1.msra.mxu0 0.0
      %1444 = vmatprep.subr.mxu0 0.0
      %1445 = vmatpush1.msra.mxu0 0.0
      %1446 = vmatprep.subr.mxu0 0.0
      %1447 = vmatpush1.msra.mxu0 %v1335
      %1448 = vmatprep.subr.mxu0 0.0
      %1449 = vmatpush2.msra.mxu0 0.0
      %1450 = vmatprep.subr.mxu0 0.0
      %1451 = vmatpush2.msra.mxu0 0.0
      %1452 = vmatprep.subr.mxu0 0.0
      %1453 = vmatpush2.msra.mxu0 0.0
      %1454 = vmatprep.subr.mxu0 0.0
      %1455 = vmatpush2.msra.mxu0 0.0
      %1456 = vmatprep.subr.mxu0 0.0
      %1457 = vmatpush2.msra.mxu0 0.0
      %1458 = vmatprep.subr.mxu0 0.0
      %1459 = vmatpush2.msra.mxu0 0.0
      %1460 = vmatprep.subr.mxu0 0.0
      %1461 = vmatpush2.msra.mxu0 0.0
      %1462 = vmatprep.subr.mxu0 0.0
      %1463 = vmatpush2.msra.mxu0 0.0
      %1464 = vmatprep.subr.mxu0 0.0
      %1465 = vmatpush2.msra.mxu0 0.0
      %1466 = vmatprep.subr.mxu0 0.0
      %1467 = vmatpush2.msra.mxu0 0.0
      %1468 = vmatprep.subr.mxu0 0.0
      %1469 = vmatpush2.msra.mxu0 0.0
      %1470 = vmatprep.subr.mxu0 0.0
      %1471 = vmatpush2.msra.mxu0 0.0
      %1472 = vmatprep.subr.mxu0 0.0
      %1473 = vmatpush2.msra.mxu0 0.0
      %1474 = vmatprep.subr.mxu0 0.0
      %1475 = vmatpush2.msra.mxu0 0.0
      %1476 = vmatprep.subr.mxu0 0.0
      %1477 = vmatpush2.msra.mxu0 0.0
      %1478 = vmatprep.subr.mxu0 0.0
      %1479 = vmatpush2.msra.mxu0 0.0
      %1480 = vmatprep.mubr.f32.mxu0 0.0
      %1481 = vmatmul.mubr.f32.gmra.mxu0 %v1414
      %v1482 = vpop.f32.mrf.mxu0
      %v1483 = vadd.f32 0.0, %v1482
      %v1484 = vpop.f32.mrf.mxu0
      %1485 = vdwg.mxu0
      %s1486 = scalar_lea.vmem %s478, 16
      %v1487 = vld [vmem:[%s1486] sm:$0xff]
      %v1489 = vsel %vm504, %v1487, 0
      %1491 = vmatprep.subr.mxu0 0.0
      %1492 = vmatpush1.msra.mxu0 0.0
      %1493 = vmatprep.subr.mxu0 0.0
      %1494 = vmatpush1.msra.mxu0 0.0
      %1495 = vmatprep.subr.mxu0 0.0
      %1496 = vmatpush1.msra.mxu0 0.0
      %1497 = vmatprep.subr.mxu0 0.0
      %1498 = vmatpush1.msra.mxu0 0.0
      %1499 = vmatprep.subr.mxu0 0.0
      %1500 = vmatpush1.msra.mxu0 0.0
      %1501 = vmatprep.subr.mxu0 0.0
      %1502 = vmatpush1.msra.mxu0 0.0
      %1503 = vmatprep.subr.mxu0 0.0
      %1504 = vmatpush1.msra.mxu0 0.0
      %1505 = vmatprep.subr.mxu0 0.0
      %1506 = vmatpush1.msra.mxu0 0.0
      %1507 = vmatprep.subr.mxu0 0.0
      %1508 = vmatpush1.msra.mxu0 0.0
      %1509 = vmatprep.subr.mxu0 0.0
      %1510 = vmatpush1.msra.mxu0 0.0
      %1511 = vmatprep.subr.mxu0 0.0
      %1512 = vmatpush1.msra.mxu0 0.0
      %1513 = vmatprep.subr.mxu0 0.0
      %1514 = vmatpush1.msra.mxu0 0.0
      %1515 = vmatprep.subr.mxu0 0.0
      %1516 = vmatpush1.msra.mxu0 0.0
      %1517 = vmatprep.subr.mxu0 0.0
      %1518 = vmatpush1.msra.mxu0 0.0
      %1519 = vmatprep.subr.mxu0 0.0
      %1520 = vmatpush1.msra.mxu0 0.0
      %1521 = vmatprep.subr.mxu0 0.0
      %1522 = vmatpush1.msra.mxu0 %v1410
      %1523 = vmatprep.subr.mxu0 0.0
      %1524 = vmatpush2.msra.mxu0 0.0
      %1525 = vmatprep.subr.mxu0 0.0
      %1526 = vmatpush2.msra.mxu0 0.0
      %1527 = vmatprep.subr.mxu0 0.0
      %1528 = vmatpush2.msra.mxu0 0.0
      %1529 = vmatprep.subr.mxu0 0.0
      %1530 = vmatpush2.msra.mxu0 0.0
      %1531 = vmatprep.subr.mxu0 0.0
      %1532 = vmatpush2.msra.mxu0 0.0
      %1533 = vmatprep.subr.mxu0 0.0
      %1534 = vmatpush2.msra.mxu0 0.0
      %1535 = vmatprep.subr.mxu0 0.0
      %1536 = vmatpush2.msra.mxu0 0.0
      %1537 = vmatprep.subr.mxu0 0.0
      %1538 = vmatpush2.msra.mxu0 0.0
      %1539 = vmatprep.subr.mxu0 0.0
      %1540 = vmatpush2.msra.mxu0 0.0
      %1541 = vmatprep.subr.mxu0 0.0
      %1542 = vmatpush2.msra.mxu0 0.0
      %1543 = vmatprep.subr.mxu0 0.0
      %1544 = vmatpush2.msra.mxu0 0.0
      %1545 = vmatprep.subr.mxu0 0.0
      %1546 = vmatpush2.msra.mxu0 0.0
      %1547 = vmatprep.subr.mxu0 0.0
      %1548 = vmatpush2.msra.mxu0 0.0
      %1549 = vmatprep.subr.mxu0 0.0
      %1550 = vmatpush2.msra.mxu0 0.0
      %1551 = vmatprep.subr.mxu0 0.0
      %1552 = vmatpush2.msra.mxu0 0.0
      %1553 = vmatprep.subr.mxu0 0.0
      %1554 = vmatpush2.msra.mxu0 0.0
      %1555 = vmatprep.mubr.f32.mxu0 0.0
      %1556 = vmatmul.mubr.f32.gmra.mxu0 %v1489
      %v1557 = vpop.f32.mrf.mxu0
      %v1558 = vadd.f32 0.0, %v1557
      %v1559 = vpop.f32.mrf.mxu0
      %1560 = vdwg.mxu0
      %1562 = vrot.lane.b32.xlu0 %v1558, 2
      %v1563 = vpop.permute.xlu0 %1562
      %v1565 = vsel %vm958, %v1483, %v1563
      %s1566 = scalar_lea.vmem %s468, 24
      %v1567 = vld [vmem:[%s1566] sm:$0xff]
      %1568 = vmatprep.subr.mxu0 0.0
      %1569 = vmatpush1.msra.mxu0 0.0
      %1570 = vmatprep.subr.mxu0 0.0
      %1571 = vmatpush1.msra.mxu0 0.0
      %1572 = vmatprep.subr.mxu0 0.0
      %1573 = vmatpush1.msra.mxu0 0.0
      %1574 = vmatprep.subr.mxu0 0.0
      %1575 = vmatpush1.msra.mxu0 0.0
      %1576 = vmatprep.subr.mxu0 0.0
      %1577 = vmatpush1.msra.mxu0 0.0
      %1578 = vmatprep.subr.mxu0 0.0
      %1579 = vmatpush1.msra.mxu0 0.0
      %1580 = vmatprep.subr.mxu0 0.0
      %1581 = vmatpush1.msra.mxu0 0.0
      %1582 = vmatprep.subr.mxu0 0.0
      %1583 = vmatpush1.msra.mxu0 0.0
      %1584 = vmatprep.subr.mxu0 0.0
      %1585 = vmatpush1.msra.mxu0 0.0
      %1586 = vmatprep.subr.mxu0 0.0
      %1587 = vmatpush1.msra.mxu0 0.0
      %1588 = vmatprep.subr.mxu0 0.0
      %1589 = vmatpush1.msra.mxu0 0.0
      %1590 = vmatprep.subr.mxu0 0.0
      %1591 = vmatpush1.msra.mxu0 0.0
      %1592 = vmatprep.subr.mxu0 0.0
      %1593 = vmatpush1.msra.mxu0 0.0
      %1594 = vmatprep.subr.mxu0 0.0
      %1595 = vmatpush1.msra.mxu0 0.0
      %1596 = vmatprep.subr.mxu0 0.0
      %1597 = vmatpush1.msra.mxu0 0.0
      %1598 = vmatprep.subr.mxu0 0.0
      %1599 = vmatpush1.msra.mxu0 %v650
      %1600 = vmatprep.subr.mxu0 0.0
      %1601 = vmatpush2.msra.mxu0 0.0
      %1602 = vmatprep.subr.mxu0 0.0
      %1603 = vmatpush2.msra.mxu0 0.0
      %1604 = vmatprep.subr.mxu0 0.0
      %1605 = vmatpush2.msra.mxu0 0.0
      %1606 = vmatprep.subr.mxu0 0.0
      %1607 = vmatpush2.msra.mxu0 0.0
      %1608 = vmatprep.subr.mxu0 0.0
      %1609 = vmatpush2.msra.mxu0 0.0
      %1610 = vmatprep.subr.mxu0 0.0
      %1611 = vmatpush2.msra.mxu0 0.0
      %1612 = vmatprep.subr.mxu0 0.0
      %1613 = vmatpush2.msra.mxu0 0.0
      %1614 = vmatprep.subr.mxu0 0.0
      %1615 = vmatpush2.msra.mxu0 0.0
      %1616 = vmatprep.subr.mxu0 0.0
      %1617 = vmatpush2.msra.mxu0 0.0
      %1618 = vmatprep.subr.mxu0 0.0
      %1619 = vmatpush2.msra.mxu0 0.0
      %1620 = vmatprep.subr.mxu0 0.0
      %1621 = vmatpush2.msra.mxu0 0.0
      %1622 = vmatprep.subr.mxu0 0.0
      %1623 = vmatpush2.msra.mxu0 0.0
      %1624 = vmatprep.subr.mxu0 0.0
      %1625 = vmatpush2.msra.mxu0 0.0
      %1626 = vmatprep.subr.mxu0 0.0
      %1627 = vmatpush2.msra.mxu0 0.0
      %1628 = vmatprep.subr.mxu0 0.0
      %1629 = vmatpush2.msra.mxu0 0.0
      %1630 = vmatprep.subr.mxu0 0.0
      %1631 = vmatpush2.msra.mxu0 0.0
      %1632 = vmatprep.mubr.f32.mxu0 0.0
      %1633 = vmatmul.mubr.f32.gmra.mxu0 %v655
      %v1634 = vpop.f32.mrf.mxu0
      %v1635 = vadd.f32 0.0, %v1634
      %v1636 = vpop.f32.mrf.mxu0
      %1637 = vdwg.mxu0
      %v1638 = vadd.f32 %v1567, %v1635
      %1640 = vrot.lane.b32.xlu0 %v650, 126
      %v1641 = vpop.permute.xlu0 %1640
      %1643 = vmatprep.subr.mxu0 0.0
      %1644 = vmatpush1.msra.mxu0 0.0
      %1645 = vmatprep.subr.mxu0 0.0
      %1646 = vmatpush1.msra.mxu0 0.0
      %1647 = vmatprep.subr.mxu0 0.0
      %1648 = vmatpush1.msra.mxu0 0.0
      %1649 = vmatprep.subr.mxu0 0.0
      %1650 = vmatpush1.msra.mxu0 0.0
      %1651 = vmatprep.subr.mxu0 0.0
      %1652 = vmatpush1.msra.mxu0 0.0
      %1653 = vmatprep.subr.mxu0 0.0
      %1654 = vmatpush1.msra.mxu0 0.0
      %1655 = vmatprep.subr.mxu0 0.0
      %1656 = vmatpush1.msra.mxu0 0.0
      %1657 = vmatprep.subr.mxu0 0.0
      %1658 = vmatpush1.msra.mxu0 0.0
      %1659 = vmatprep.subr.mxu0 0.0
      %1660 = vmatpush1.msra.mxu0 0.0
      %1661 = vmatprep.subr.mxu0 0.0
      %1662 = vmatpush1.msra.mxu0 0.0
      %1663 = vmatprep.subr.mxu0 0.0
      %1664 = vmatpush1.msra.mxu0 0.0
      %1665 = vmatprep.subr.mxu0 0.0
      %1666 = vmatpush1.msra.mxu0 0.0
      %1667 = vmatprep.subr.mxu0 0.0
      %1668 = vmatpush1.msra.mxu0 0.0
      %1669 = vmatprep.subr.mxu0 0.0
      %1670 = vmatpush1.msra.mxu0 0.0
      %1671 = vmatprep.subr.mxu0 0.0
      %1672 = vmatpush1.msra.mxu0 0.0
      %1673 = vmatprep.subr.mxu0 0.0
      %1674 = vmatpush1.msra.mxu0 %v1641
      %1675 = vmatprep.subr.mxu0 0.0
      %1676 = vmatpush2.msra.mxu0 0.0
      %1677 = vmatprep.subr.mxu0 0.0
      %1678 = vmatpush2.msra.mxu0 0.0
      %1679 = vmatprep.subr.mxu0 0.0
      %1680 = vmatpush2.msra.mxu0 0.0
      %1681 = vmatprep.subr.mxu0 0.0
      %1682 = vmatpush2.msra.mxu0 0.0
      %1683 = vmatprep.subr.mxu0 0.0
      %1684 = vmatpush2.msra.mxu0 0.0
      %1685 = vmatprep.subr.mxu0 0.0
      %1686 = vmatpush2.msra.mxu0 0.0
      %1687 = vmatprep.subr.mxu0 0.0
      %1688 = vmatpush2.msra.mxu0 0.0
      %1689 = vmatprep.subr.mxu0 0.0
      %1690 = vmatpush2.msra.mxu0 0.0
      %1691 = vmatprep.subr.mxu0 0.0
      %1692 = vmatpush2.msra.mxu0 0.0
      %1693 = vmatprep.subr.mxu0 0.0
      %1694 = vmatpush2.msra.mxu0 0.0
      %1695 = vmatprep.subr.mxu0 0.0
      %1696 = vmatpush2.msra.mxu0 0.0
      %1697 = vmatprep.subr.mxu0 0.0
      %1698 = vmatpush2.msra.mxu0 0.0
      %1699 = vmatprep.subr.mxu0 0.0
      %1700 = vmatpush2.msra.mxu0 0.0
      %1701 = vmatprep.subr.mxu0 0.0
      %1702 = vmatpush2.msra.mxu0 0.0
      %1703 = vmatprep.subr.mxu0 0.0
      %1704 = vmatpush2.msra.mxu0 0.0
      %1705 = vmatprep.subr.mxu0 0.0
      %1706 = vmatpush2.msra.mxu0 0.0
      %1707 = vmatprep.mubr.f32.mxu0 0.0
      %1708 = vmatmul.mubr.f32.gmra.mxu0 %v733
      %v1709 = vpop.f32.mrf.mxu0
      %v1710 = vadd.f32 0.0, %v1709
      %v1711 = vpop.f32.mrf.mxu0
      %1712 = vdwg.mxu0
      %v1713 = vadd.f32 %v1567, %v1710
      %s1714 = scalar_lea.vmem %s473, 24
      %v1715 = vld [vmem:[%s1714] sm:$0xff]
      %v1717 = vsel %vm504, %v1715, 0
      %1719 = vmatprep.subr.mxu0 0.0
      %1720 = vmatpush1.msra.mxu0 0.0
      %1721 = vmatprep.subr.mxu0 0.0
      %1722 = vmatpush1.msra.mxu0 0.0
      %1723 = vmatprep.subr.mxu0 0.0
      %1724 = vmatpush1.msra.mxu0 0.0
      %1725 = vmatprep.subr.mxu0 0.0
      %1726 = vmatpush1.msra.mxu0 0.0
      %1727 = vmatprep.subr.mxu0 0.0
      %1728 = vmatpush1.msra.mxu0 0.0
      %1729 = vmatprep.subr.mxu0 0.0
      %1730 = vmatpush1.msra.mxu0 0.0
      %1731 = vmatprep.subr.mxu0 0.0
      %1732 = vmatpush1.msra.mxu0 0.0
      %1733 = vmatprep.subr.mxu0 0.0
      %1734 = vmatpush1.msra.mxu0 0.0
      %1735 = vmatprep.subr.mxu0 0.0
      %1736 = vmatpush1.msra.mxu0 0.0
      %1737 = vmatprep.subr.mxu0 0.0
      %1738 = vmatpush1.msra.mxu0 0.0
      %1739 = vmatprep.subr.mxu0 0.0
      %1740 = vmatpush1.msra.mxu0 0.0
      %1741 = vmatprep.subr.mxu0 0.0
      %1742 = vmatpush1.msra.mxu0 0.0
      %1743 = vmatprep.subr.mxu0 0.0
      %1744 = vmatpush1.msra.mxu0 0.0
      %1745 = vmatprep.subr.mxu0 0.0
      %1746 = vmatpush1.msra.mxu0 0.0
      %1747 = vmatprep.subr.mxu0 0.0
      %1748 = vmatpush1.msra.mxu0 0.0
      %1749 = vmatprep.subr.mxu0 0.0
      %1750 = vmatpush1.msra.mxu0 %v1638
      %1751 = vmatprep.subr.mxu0 0.0
      %1752 = vmatpush2.msra.mxu0 0.0
      %1753 = vmatprep.subr.mxu0 0.0
      %1754 = vmatpush2.msra.mxu0 0.0
      %1755 = vmatprep.subr.mxu0 0.0
      %1756 = vmatpush2.msra.mxu0 0.0
      %1757 = vmatprep.subr.mxu0 0.0
      %1758 = vmatpush2.msra.mxu0 0.0
      %1759 = vmatprep.subr.mxu0 0.0
      %1760 = vmatpush2.msra.mxu0 0.0
      %1761 = vmatprep.subr.mxu0 0.0
      %1762 = vmatpush2.msra.mxu0 0.0
      %1763 = vmatprep.subr.mxu0 0.0
      %1764 = vmatpush2.msra.mxu0 0.0
      %1765 = vmatprep.subr.mxu0 0.0
      %1766 = vmatpush2.msra.mxu0 0.0
      %1767 = vmatprep.subr.mxu0 0.0
      %1768 = vmatpush2.msra.mxu0 0.0
      %1769 = vmatprep.subr.mxu0 0.0
      %1770 = vmatpush2.msra.mxu0 0.0
      %1771 = vmatprep.subr.mxu0 0.0
      %1772 = vmatpush2.msra.mxu0 0.0
      %1773 = vmatprep.subr.mxu0 0.0
      %1774 = vmatpush2.msra.mxu0 0.0
      %1775 = vmatprep.subr.mxu0 0.0
      %1776 = vmatpush2.msra.mxu0 0.0
      %1777 = vmatprep.subr.mxu0 0.0
      %1778 = vmatpush2.msra.mxu0 0.0
      %1779 = vmatprep.subr.mxu0 0.0
      %1780 = vmatpush2.msra.mxu0 0.0
      %1781 = vmatprep.subr.mxu0 0.0
      %1782 = vmatpush2.msra.mxu0 0.0
      %1783 = vmatprep.mubr.f32.mxu0 0.0
      %1784 = vmatmul.mubr.f32.gmra.mxu0 %v1717
      %v1785 = vpop.f32.mrf.mxu0
      %v1786 = vadd.f32 0.0, %v1785
      %v1787 = vpop.f32.mrf.mxu0
      %1788 = vdwg.mxu0
      %s1789 = scalar_lea.vmem %s478, 24
      %v1790 = vld [vmem:[%s1789] sm:$0xff]
      %v1792 = vsel %vm504, %v1790, 0
      %1794 = vmatprep.subr.mxu0 0.0
      %1795 = vmatpush1.msra.mxu0 0.0
      %1796 = vmatprep.subr.mxu0 0.0
      %1797 = vmatpush1.msra.mxu0 0.0
      %1798 = vmatprep.subr.mxu0 0.0
      %1799 = vmatpush1.msra.mxu0 0.0
      %1800 = vmatprep.subr.mxu0 0.0
      %1801 = vmatpush1.msra.mxu0 0.0
      %1802 = vmatprep.subr.mxu0 0.0
      %1803 = vmatpush1.msra.mxu0 0.0
      %1804 = vmatprep.subr.mxu0 0.0
      %1805 = vmatpush1.msra.mxu0 0.0
      %1806 = vmatprep.subr.mxu0 0.0
      %1807 = vmatpush1.msra.mxu0 0.0
      %1808 = vmatprep.subr.mxu0 0.0
      %1809 = vmatpush1.msra.mxu0 0.0
      %1810 = vmatprep.subr.mxu0 0.0
      %1811 = vmatpush1.msra.mxu0 0.0
      %1812 = vmatprep.subr.mxu0 0.0
      %1813 = vmatpush1.msra.mxu0 0.0
      %1814 = vmatprep.subr.mxu0 0.0
      %1815 = vmatpush1.msra.mxu0 0.0
      %1816 = vmatprep.subr.mxu0 0.0
      %1817 = vmatpush1.msra.mxu0 0.0
      %1818 = vmatprep.subr.mxu0 0.0
      %1819 = vmatpush1.msra.mxu0 0.0
      %1820 = vmatprep.subr.mxu0 0.0
      %1821 = vmatpush1.msra.mxu0 0.0
      %1822 = vmatprep.subr.mxu0 0.0
      %1823 = vmatpush1.msra.mxu0 0.0
      %1824 = vmatprep.subr.mxu0 0.0
      %1825 = vmatpush1.msra.mxu0 %v1713
      %1826 = vmatprep.subr.mxu0 0.0
      %1827 = vmatpush2.msra.mxu0 0.0
      %1828 = vmatprep.subr.mxu0 0.0
      %1829 = vmatpush2.msra.mxu0 0.0
      %1830 = vmatprep.subr.mxu0 0.0
      %1831 = vmatpush2.msra.mxu0 0.0
      %1832 = vmatprep.subr.mxu0 0.0
      %1833 = vmatpush2.msra.mxu0 0.0
      %1834 = vmatprep.subr.mxu0 0.0
      %1835 = vmatpush2.msra.mxu0 0.0
      %1836 = vmatprep.subr.mxu0 0.0
      %1837 = vmatpush2.msra.mxu0 0.0
      %1838 = vmatprep.subr.mxu0 0.0
      %1839 = vmatpush2.msra.mxu0 0.0
      %1840 = vmatprep.subr.mxu0 0.0
      %1841 = vmatpush2.msra.mxu0 0.0
      %1842 = vmatprep.subr.mxu0 0.0
      %1843 = vmatpush2.msra.mxu0 0.0
      %1844 = vmatprep.subr.mxu0 0.0
      %1845 = vmatpush2.msra.mxu0 0.0
      %1846 = vmatprep.subr.mxu0 0.0
      %1847 = vmatpush2.msra.mxu0 0.0
      %1848 = vmatprep.subr.mxu0 0.0
      %1849 = vmatpush2.msra.mxu0 0.0
      %1850 = vmatprep.subr.mxu0 0.0
      %1851 = vmatpush2.msra.mxu0 0.0
      %1852 = vmatprep.subr.mxu0 0.0
      %1853 = vmatpush2.msra.mxu0 0.0
      %1854 = vmatprep.subr.mxu0 0.0
      %1855 = vmatpush2.msra.mxu0 0.0
      %1856 = vmatprep.subr.mxu0 0.0
      %1857 = vmatpush2.msra.mxu0 0.0
      %1858 = vmatprep.mubr.f32.mxu0 0.0
      %1859 = vmatmul.mubr.f32.gmra.mxu0 %v1792
      %v1860 = vpop.f32.mrf.mxu0
      %v1861 = vadd.f32 0.0, %v1860
      %v1862 = vpop.f32.mrf.mxu0
      %1863 = vdwg.mxu0
      %1865 = vrot.lane.b32.xlu0 %v1861, 2
      %v1866 = vpop.permute.xlu0 %1865
      %v1868 = vsel %vm958, %v1786, %v1866
      %v1869 = vld [vmem:[%s9] sm:$0xf]
      %vm1870 = vcmask 31744
      %v1872 = vsel %vm1870, %v959, 0
      %v1875 = vsel %vm1870, %v1262, 0
      %v1878 = vsel %vm1870, %v1565, 0
      %v1881 = vsel %vm1870, %v1868, 0
      %vm1883 = vcmask 1043456
      %v1885 = vsel %vm1883, %v1869, 0
      %1887 = vmatprep.subr.mxu0 0.0
      %1888 = vmatpush1.msra.mxu0 0.0
      %1889 = vmatprep.subr.mxu0 0.0
      %1890 = vmatpush1.msra.mxu0 0.0
      %1891 = vmatprep.subr.mxu0 0.0
      %1892 = vmatpush1.msra.mxu0 0.0
      %1893 = vmatprep.subr.mxu0 0.0
      %1894 = vmatpush1.msra.mxu0 0.0
      %1895 = vmatprep.subr.mxu0 0.0
      %1896 = vmatpush1.msra.mxu0 0.0
      %1897 = vmatprep.subr.mxu0 0.0
      %1898 = vmatpush1.msra.mxu0 0.0
      %1899 = vmatprep.subr.mxu0 0.0
      %1900 = vmatpush1.msra.mxu0 0.0
      %1901 = vmatprep.subr.mxu0 0.0
      %1902 = vmatpush1.msra.mxu0 0.0
      %1903 = vmatprep.subr.mxu0 0.0
      %1904 = vmatpush1.msra.mxu0 0.0
      %1905 = vmatprep.subr.mxu0 0.0
      %1906 = vmatpush1.msra.mxu0 0.0
      %1907 = vmatprep.subr.mxu0 0.0
      %1908 = vmatpush1.msra.mxu0 0.0
      %1909 = vmatprep.subr.mxu0 0.0
      %1910 = vmatpush1.msra.mxu0 0.0
      %1911 = vmatprep.subr.mxu0 0.0
      %1912 = vmatpush1.msra.mxu0 0.0
      %1913 = vmatprep.subr.mxu0 0.0
      %1914 = vmatpush1.msra.mxu0 0.0
      %1915 = vmatprep.subr.mxu0 0.0
      %1916 = vmatpush1.msra.mxu0 0.0
      %1917 = vmatprep.subr.mxu0 0.0
      %1918 = vmatpush1.msra.mxu0 %v1885
      %1919 = vmatprep.subr.mxu0 0.0
      %1920 = vmatpush2.msra.mxu0 0.0
      %1921 = vmatprep.subr.mxu0 0.0
      %1922 = vmatpush2.msra.mxu0 0.0
      %1923 = vmatprep.subr.mxu0 0.0
      %1924 = vmatpush2.msra.mxu0 0.0
      %1925 = vmatprep.subr.mxu0 0.0
      %1926 = vmatpush2.msra.mxu0 0.0
      %1927 = vmatprep.subr.mxu0 0.0
      %1928 = vmatpush2.msra.mxu0 0.0
      %1929 = vmatprep.subr.mxu0 0.0
      %1930 = vmatpush2.msra.mxu0 0.0
      %1931 = vmatprep.subr.mxu0 0.0
      %1932 = vmatpush2.msra.mxu0 0.0
      %1933 = vmatprep.subr.mxu0 0.0
      %1934 = vmatpush2.msra.mxu0 0.0
      %1935 = vmatprep.subr.mxu0 0.0
      %1936 = vmatpush2.msra.mxu0 0.0
      %1937 = vmatprep.subr.mxu0 0.0
      %1938 = vmatpush2.msra.mxu0 0.0
      %1939 = vmatprep.subr.mxu0 0.0
      %1940 = vmatpush2.msra.mxu0 0.0
      %1941 = vmatprep.subr.mxu0 0.0
      %1942 = vmatpush2.msra.mxu0 0.0
      %1943 = vmatprep.subr.mxu0 0.0
      %1944 = vmatpush2.msra.mxu0 0.0
      %1945 = vmatprep.subr.mxu0 0.0
      %1946 = vmatpush2.msra.mxu0 0.0
      %1947 = vmatprep.subr.mxu0 0.0
      %1948 = vmatpush2.msra.mxu0 0.0
      %1949 = vmatprep.subr.mxu0 0.0
      %1950 = vmatpush2.msra.mxu0 0.0
      %1951 = vmatprep.mubr.f32.mxu0 0.0
      %1952 = vmatmul.mubr.f32.gmra.mxu0 %v1872
      %v1953 = vpop.f32.mrf.mxu0
      %v1954 = vadd.f32 0.0, %v1953
      %v1955 = vpop.f32.mrf.mxu0
      %1956 = vmatprep.mubr.f32.mxu0 0.0
      %1957 = vmatmul.mubr.f32.gmra.mxu0 %v1875
      %v1958 = vpop.f32.mrf.mxu0
      %v1959 = vadd.f32 0.0, %v1958
      %v1960 = vpop.f32.mrf.mxu0
      %1961 = vmatprep.mubr.f32.mxu0 0.0
      %1962 = vmatmul.mubr.f32.gmra.mxu0 %v1878
      %v1963 = vpop.f32.mrf.mxu0
      %v1964 = vadd.f32 0.0, %v1963
      %v1965 = vpop.f32.mrf.mxu0
      %1966 = vmatprep.mubr.f32.mxu0 0.0
      %1967 = vmatmul.mubr.f32.gmra.mxu0 %v1881
      %v1968 = vpop.f32.mrf.mxu0
      %v1969 = vadd.f32 0.0, %v1968
      %v1970 = vpop.f32.mrf.mxu0
      %1971 = vdwg.mxu0
      %s1972 = sld [smem:[#allocation2]]
      %vm1973 = vcmp.ge.f32.partialorder %v1954, 0.0
      %vm1974 = vcmp.ge.f32.partialorder %v1959, 0.0
      %vm1975 = vcmp.ge.f32.partialorder %v1964, 0.0
      %vm1976 = vcmp.ge.f32.partialorder %v1969, 0.0
      %v1977 = vstv %s1972
      %v1978 = vmul.f32 %v1977, %v1954
      %v1979 = vmul.f32 %v1977, %v1959
      %v1980 = vmul.f32 %v1977, %v1964
      %v1981 = vmul.f32 %v1977, %v1969
      %v1982 = vsel %vm1973, %v1954, %v1978
      %v1983 = vsel %vm1974, %v1959, %v1979
      %v1984 = vsel %vm1975, %v1964, %v1980
      %v1985 = vsel %vm1976, %v1969, %v1981
      %1986 = vst.msk [vmem:[%s501] sm:$0xff] %vm539, %v1982
      %1987 = vst.msk [vmem:[%s501 + $0x8] sm:$0xff] %vm539, %v1983
      %1988 = vst.msk [vmem:[%s501 + $0x10] sm:$0xff] %vm539, %v1984
      %1989 = vst.msk [vmem:[%s501 + $0x18] sm:$0xff] %vm539, %v1985
      %p1990 = scmp.lt.s32.totalorder %s23, 1
      %s1991 = scalar_select %p1990, %s23, 1
      %s1992 = smul.addr %s1991, 4
      %s1993 = smul.addr %s1992, 8
      %s1994 = scalar_lea.vmem %s11, %s1993
      // Predicated region
      $region65: #{tpu_custom_call.1} parent=63 // pred_check
        %p1995 = pneg %p307
      $region66: #{tpu_custom_call.1} parent=63 // pred_check_branch
        %1997 = sbr.rel (%p1995) target = $region68
      $region67: #{tpu_custom_call.1} parent=63 // pred_region
        _
      $region68: #{tpu_custom_call.1} parent=63 // pred_fallthru
        _
    $region64: #{tpu_custom_call.1} parent=5 // pred_fallthru
      _
    %p1998 = scmp.le.s32.totalorder 2, %s18
    // Predicated region
    $region69: #{tpu_custom_call.1} parent=5 // pred_check
      %p1999 = pneg %p1998
    $region70: #{tpu_custom_call.1} parent=5 // pred_check_branch
      %2001 = sbr.rel (%p1999) target = $region72
    $region71: #{tpu_custom_call.1} parent=5 // pred_region
      %s2002 = ssub.s32 %s18, 2
      // Predicated region
      $region73: #{tpu_custom_call.1} parent=71 // pred_check
        %p2003 = pneg %p313
      $region74: #{tpu_custom_call.1} parent=71 // pred_check_branch
        %2005 = sbr.rel (%p2003) target = $region76
      $region75: #{tpu_custom_call.1} parent=71 // pred_region
        %p2006 = scmp.lt.s32.totalorder %s24, 1
        %s2007 = scalar_select %p2006, %s24, 1
        %s2008 = smul.addr %s2007, 4
        %s2009 = smul.addr %s2008, 8
        %s2010 = scalar_lea.vmem %s11, %s2009
      $region76: #{tpu_custom_call.1} parent=71 // pred_fallthru
        _
    $region72: #{tpu_custom_call.1} parent=5 // pred_fallthru
      _
  $region6: #{tpu_custom_call.1} parent=0 // loop_footer
    %s22 = sadd.s32 1, %s18
  $region7: #{tpu_custom_call.1} parent=0 // loop_footer_branch
    %17 = sbr.rel target = $region3
  $region8: #{tpu_custom_call.1} parent=0 // loop_exit
    _

</llo_original>
